<compile_context>
chip_gen: v7x
topology: tpu7x:2x2x1
jax: 0.10.0
libtpu: 0.0.40
codegen_flags: <defaults>
</compile_context>

<pallas_src>
import functools

import jax
import jax.numpy as jnp
from jax.experimental import pallas as pl
from jax.experimental.pallas import tpu as pltpu


def _round_up(x, m):
    return ((x + m - 1) // m) * m


# ---------------------------------------------------------------------------
# Fused Pallas kernel: one TIME CHUNK (t_chunk steps x batch_pad rows) per grid
# iteration.  Internal layout is time-major: row = t * batch_pad + b.
# ---------------------------------------------------------------------------
def _fused_drqn_kernel(
        x_ref, h0_ref, c0_ref,
        w1_ref, b1_ref, w2_ref, b2_ref,
        wih_ref, whh_ref, blstm_ref, wout_ref, bout_ref,
        q_ref, hn_ref, cn_ref,
        h_scr, c_scr, hseq_scr, gates_scr,
        *, batch_pad, t_chunk, hidden_pad, seq_len, seq_pad, unroll):
    step = pl.program_id(0)
    mm_dtype = w1_ref.dtype                       # matmul operand dtype (bf16/f32)

    # (h, c) are carried across chunks in VMEM scratch; load the provided
    # initial state on the first chunk only.
    @pl.when(step == 0)
    def _():
        h_scr[...] = h0_ref[...]
        c_scr[...] = c0_ref[...]

    # ---- Stage 1: feature MLP + hoisted LSTM input projection ---------------
    # One large MXU matmul per layer for the whole chunk (rows = t_chunk*b_pad);
    # f32 accumulation, f32 bias/activation math.
    x = x_ref[...]                                                  # (rows, D)
    f1 = jnp.dot(x, w1_ref[...], preferred_element_type=jnp.float32) + b1_ref[...]
    f1 = jnp.where(f1 > 0, f1, 0.01 * f1)                           # LeakyReLU(0.01)
    f2 = jnp.dot(f1.astype(mm_dtype), w2_ref[...],
                 preferred_element_type=jnp.float32) + b2_ref[...]
    f2 = jnp.where(f2 > 0, f2, 0.01 * f2)
    # x_t @ W_ih + (b_ih + b_hh) for every timestep of the chunk, OUTSIDE the loop.
    gates_scr[...] = (jnp.dot(f2.astype(mm_dtype), wih_ref[...],
                              preferred_element_type=jnp.float32)
                      + blstm_ref[...])                             # (rows, 4H)

    # ---- Stage 2: sequential LSTM recurrence over the chunk (VMEM only) -----
    # (h, c) live in vregs as fori_loop carries; per-step VMEM traffic is one
    # gate-slice load and one h store into hseq_scr.
    ragged = seq_pad != seq_len   # static python bool

    def body(t, carry):
        h, c = carry
        r0 = pl.multiple_of(t * batch_pad, 8)           # 8-aligned sublane offset
        g = gates_scr[pl.ds(r0, batch_pad), :] + jnp.dot(
            h.astype(mm_dtype), whh_ref[...], preferred_element_type=jnp.float32)
        # PyTorch gate order: i, f, g, o -- all slices are 128-lane aligned.
        i_g = jax.nn.sigmoid(g[:, 0 * hidden_pad:1 * hidden_pad])
        f_g = jax.nn.sigmoid(g[:, 1 * hidden_pad:2 * hidden_pad])
        g_g = jnp.tanh(g[:, 2 * hidden_pad:3 * hidden_pad])
        o_g = jax.nn.sigmoid(g[:, 3 * hidden_pad:4 * hidden_pad])
        c_new = f_g * c + i_g * g_g
        h_new = o_g * jnp.tanh(c_new)
        hseq_scr[pl.ds(r0, batch_pad), :] = h_new        # stays in VMEM
        if ragged:
            # Mask padded tail timesteps out of the carried state.
            valid = step * t_chunk + t < seq_len
            h_new = jnp.where(valid, h_new, h)
            c_new = jnp.where(valid, c_new, c)
        return (h_new, c_new)

    h_fin, c_fin = jax.lax.fori_loop(0, t_chunk, body,
                                     (h_scr[...], c_scr[...]), unroll=unroll)
    # Write the carry back to VMEM once per chunk (not per timestep).
    h_scr[...] = h_fin
    c_scr[...] = c_fin

    # ---- Stage 3: output head on the whole chunk (one matmul, one dense store)
    q = (jnp.dot(hseq_scr[...].astype(mm_dtype), wout_ref[...],
                 preferred_element_type=jnp.float32) + bout_ref[...])
    q_ref[...] = q.astype(q_ref.dtype)

    # Final LSTM state: write once, on the last chunk only.
    @pl.when(step == pl.num_programs(0) - 1)
    def _():
        hn_ref[...] = h_scr[...]
        cn_ref[...] = c_scr[...]


# ---------------------------------------------------------------------------
# Parameter init (matches the module's _init_weights: W ~ N(0, 0.1), b = 0)
# ---------------------------------------------------------------------------
def init_params(key, input_dim, hidden_size, action_dim):
    k1, k2, k3, k4, k5 = jax.random.split(key, 5)
    std = 0.1
    return {
        "w1": jax.random.normal(k1, (input_dim, hidden_size), jnp.float32) * std,
        "b1": jnp.zeros((1, hidden_size), jnp.float32),
        "w2": jax.random.normal(k2, (hidden_size, hidden_size), jnp.float32) * std,
        "b2": jnp.zeros((1, hidden_size), jnp.float32),
        # LSTM weight_ih / weight_hh stored transposed as (H, 4H); gate order i,f,g,o
        "w_ih": jax.random.normal(k3, (hidden_size, 4 * hidden_size), jnp.float32) * std,
        "w_hh": jax.random.normal(k4, (hidden_size, 4 * hidden_size), jnp.float32) * std,
        # b_ih + b_hh combined (both zero here)
        "b_lstm": jnp.zeros((1, 4 * hidden_size), jnp.float32),
        "w_out": jax.random.normal(k5, (hidden_size, action_dim), jnp.float32) * std,
        "b_out": jnp.zeros((1, action_dim), jnp.float32),
    }


# ---------------------------------------------------------------------------
# Lane-pad + dtype-cast the weights for the kernel (exact: padded lanes are 0).
# ---------------------------------------------------------------------------
def _pad_params_for_kernel(params, hidden, hidden_pad, action_dim, action_pad,
                           mm_dtype):
    def pad2(w, r_pad, c_pad):
        return jnp.pad(w, ((0, r_pad - w.shape[0]), (0, c_pad - w.shape[1])))

    def pad_gates(w, r_pad):
        # (r, 4H) -> (r_pad, 4*H_pad), keeping per-gate blocks (i,f,g,o) aligned
        # to multiples of hidden_pad lanes.
        r = w.shape[0]
        blocks = []
        for k in range(4):
            blk = w[:, k * hidden:(k + 1) * hidden]
            blocks.append(jnp.pad(blk, ((0, r_pad - r), (0, hidden_pad - hidden))))
        return jnp.concatenate(blocks, axis=1)

    cast = lambda w: w.astype(mm_dtype)
    return {
        "w1": cast(pad2(params["w1"], params["w1"].shape[0], hidden_pad)),
        "b1": pad2(params["b1"], 1, hidden_pad),
        "w2": cast(pad2(params["w2"], hidden_pad, hidden_pad)),
        "b2": pad2(params["b2"], 1, hidden_pad),
        "w_ih": cast(pad_gates(params["w_ih"], hidden_pad)),
        "w_hh": cast(pad_gates(params["w_hh"], hidden_pad)),
        "b_lstm": pad_gates(params["b_lstm"], 1),
        "w_out": cast(pad2(params["w_out"], hidden_pad, action_pad)),
        "b_out": pad2(params["b_out"], 1, action_pad),
    }


# ---------------------------------------------------------------------------
# Generation-aware chunk sizing + explicit VMEM budget.
# ---------------------------------------------------------------------------
def _chunk_and_vmem_budget(seq, b_pad, input_dim, hidden_pad, action_pad,
                           mm_itemsize, max_rows_per_chunk):
    try:
        vmem_cap = int(pltpu.get_tpu_info().vmem_capacity_bytes)
    except Exception:
        vmem_cap = 64 * 1024 * 1024          # conservative (v7x per-core VMEM)

    # Single-buffered weights + biases + carried-state buffers (bytes).
    weight_bytes = mm_itemsize * (
        input_dim * hidden_pad + hidden_pad * hidden_pad
        + 2 * hidden_pad * 4 * hidden_pad + hidden_pad * action_pad)
    bias_bytes = 4 * (2 * hidden_pad + 4 * hidden_pad + action_pad)
    state_bytes = 4 * 6 * b_pad * hidden_pad          # h0/c0 blocks, h/c scratch, hn/cn
    fixed = weight_bytes + bias_bytes + state_bytes

    # Per chunk-row VMEM: gate pre-acts (f32,4H) + hseq (f32,H)
    #                     + double-buffered x block + double-buffered q block.
    per_row = (4 * 4 * hidden_pad + 4 * hidden_pad
               + 2 * mm_itemsize * input_dim + 2 * 4 * action_pad)

    if max_rows_per_chunk is None:
        budget = int(vmem_cap * 0.4)
        max_rows = max(b_pad, (budget - fixed) // per_row)
    else:
        max_rows = max(b_pad, int(max_rows_per_chunk))
    t_chunk = max(1, min(seq, max_rows // b_pad))

    est = fixed + per_row * t_chunk * b_pad + (4 << 20)
    vmem_limit = int(min(int(vmem_cap * 0.98), max(32 << 20, est)))
    return t_chunk, vmem_limit


def _const_spec(shape, single_buffered):
    """BlockSpec for a grid-invariant operand (whole array, constant index)."""
    if single_buffered:
        return pl.BlockSpec(shape, lambda i: (0, 0), pipeline_mode=pl.Buffered(1))
    return pl.BlockSpec(shape, lambda i: (0, 0))


def _buffered_specs_supported():
    """Probe whether pipeline_mode=pl.Buffered(1) is accepted end-to-end."""
    if not hasattr(pl, "Buffered"):
        return False

    def _probe(w_ref, x_ref, o_ref):
        o_ref[...] = x_ref[...] + w_ref[...]

    try:
        w_spec = pl.BlockSpec((8, 128), lambda i: (0, 0),
                              pipeline_mode=pl.Buffered(1))
        fn = pl.pallas_call(
            _probe,
            out_shape=jax.ShapeDtypeStruct((16, 128), jnp.float32),
            grid=(2,),
            in_specs=[w_spec, pl.BlockSpec((8, 128), lambda i: (i, 0))],
            out_specs=pl.BlockSpec((8, 128), lambda i: (i, 0)),
        )
        out = fn(jnp.ones((8, 128), jnp.float32), jnp.zeros((16, 128), jnp.float32))
        jax.block_until_ready(out)
        return bool(jnp.allclose(out, 1.0))
    except Exception:
        return False


# ---------------------------------------------------------------------------
# Forward pass wrapper (only layout plumbing outside the kernel)
# ---------------------------------------------------------------------------
def recurrent_q_forward(params, state, hidden_state=None, *,
                        matmul_dtype=jnp.bfloat16,
                        max_rows_per_chunk=None,
                        single_buffer_weights=False):
    """state: (batch, seq, input_dim) float32 -> (q_values, (h_n, c_n))."""
    batch, seq, input_dim = state.shape
    hidden = params["w1"].shape[1]
    action_dim = params["w_out"].shape[1]

    hidden_pad = _round_up(hidden, 128)      # lane-aligned gate slices / MXU tiles
    action_pad = _round_up(action_dim, 128)  # lane-dense q stores
    b_pad = _round_up(batch, 8)              # sublane-aligned per-step slices

    mm_itemsize = jnp.dtype(matmul_dtype).itemsize
    t_chunk, vmem_limit = _chunk_and_vmem_budget(
        seq, b_pad, input_dim, hidden_pad, action_pad, mm_itemsize,
        max_rows_per_chunk)
    seq_pad = _round_up(seq, t_chunk)        # ragged tail masked inside the kernel
    rows = t_chunk * b_pad
    grid = (seq_pad // t_chunk,)

    # fori_loop unroll: full for short chunks / small hidden, capped otherwise.
    if t_chunk <= 8:
        unroll = t_chunk
    else:
        cap = 8 if hidden_pad <= 256 else 4
        unroll = max(d for d in range(1, cap + 1) if t_chunk % d == 0)

    kp = _pad_params_for_kernel(params, hidden, hidden_pad, action_dim,
                                action_pad, matmul_dtype)

    # Time-major flattened input: row = t * b_pad + b.
    # TODO(synk): read batch-major blocks via a 3-D BlockSpec + in-kernel
    #             pltpu.einshape to avoid this HBM transpose pass at large B*S*D.
    x_tm = jnp.transpose(state.astype(jnp.float32), (1, 0, 2))
    x_tm = jnp.pad(x_tm, ((0, seq_pad - seq), (0, b_pad - batch), (0, 0)))
    x_flat = x_tm.reshape(seq_pad * b_pad, input_dim).astype(matmul_dtype)

    if hidden_state is None:
        h0 = jnp.zeros((b_pad, hidden_pad), jnp.float32)
        c0 = jnp.zeros((b_pad, hidden_pad), jnp.float32)
    else:
        h_in, c_in = hidden_state            # PyTorch convention: (num_layers, B, H)
        h0 = jnp.pad(h_in[0].astype(jnp.float32),
                     ((0, b_pad - batch), (0, hidden_pad - hidden)))
        c0 = jnp.pad(c_in[0].astype(jnp.float32),
                     ((0, b_pad - batch), (0, hidden_pad - hidden)))

    kernel = functools.partial(
        _fused_drqn_kernel, batch_pad=b_pad, t_chunk=t_chunk,
        hidden_pad=hidden_pad, seq_len=seq, seq_pad=seq_pad, unroll=unroll)

    cspec = functools.partial(_const_spec, single_buffered=single_buffer_weights)

    # TODO(synk): on v7x (2 TensorCores) add a leading 'parallel' grid axis that
    #             splits the padded batch across cores when batch is large.
    q_flat, h_n, c_n = pl.pallas_call(
        kernel,
        out_shape=(
            jax.ShapeDtypeStruct((seq_pad * b_pad, action_pad), jnp.float32),
            jax.ShapeDtypeStruct((b_pad, hidden_pad), jnp.float32),
            jax.ShapeDtypeStruct((b_pad, hidden_pad), jnp.float32),
        ),
        grid=grid,
        in_specs=[
            pl.BlockSpec((rows, input_dim), lambda i: (i, 0)),        # state chunk
            cspec((b_pad, hidden_pad)),                               # h0
            cspec((b_pad, hidden_pad)),                               # c0
            cspec((input_dim, hidden_pad)),                           # w1
            cspec((1, hidden_pad)),                                   # b1
            cspec((hidden_pad, hidden_pad)),                          # w2
            cspec((1, hidden_pad)),                                   # b2
            cspec((hidden_pad, 4 * hidden_pad)),                      # w_ih
            cspec((hidden_pad, 4 * hidden_pad)),                      # w_hh
            cspec((1, 4 * hidden_pad)),                               # b_lstm
            cspec((hidden_pad, action_pad)),                          # w_out
            cspec((1, action_pad)),                                   # b_out
        ],
        out_specs=[
            pl.BlockSpec((rows, action_pad), lambda i: (i, 0)),       # q chunk
            pl.BlockSpec((b_pad, hidden_pad), lambda i: (0, 0)),      # h_n
            pl.BlockSpec((b_pad, hidden_pad), lambda i: (0, 0)),      # c_n
        ],
        scratch_shapes=[
            pltpu.VMEM((b_pad, hidden_pad), jnp.float32),             # h carry
            pltpu.VMEM((b_pad, hidden_pad), jnp.float32),             # c carry
            pltpu.VMEM((rows, hidden_pad), jnp.float32),              # lstm_out chunk
            pltpu.VMEM((rows, 4 * hidden_pad), jnp.float32),          # gate pre-acts
        ],
        compiler_params=pltpu.CompilerParams(
            dimension_semantics=("arbitrary",),      # chunks carry (h, c) sequentially
            vmem_limit_bytes=vmem_limit),
    )(x_flat, h0, c0,
      kp["w1"], kp["b1"], kp["w2"], kp["b2"],
      kp["w_ih"], kp["w_hh"], kp["b_lstm"], kp["w_out"], kp["b_out"])

    q_values = jnp.transpose(
        q_flat.reshape(seq_pad, b_pad, action_pad)[:seq, :batch, :action_dim],
        (1, 0, 2))
    return q_values, (h_n[:batch, :hidden][None], c_n[:batch, :hidden][None])


# ---------------------------------------------------------------------------
# Pure-JAX reference (for the numerical check in __main__)
# ---------------------------------------------------------------------------
def _reference_forward(params, state):
    batch, seq, input_dim = state.shape
    hidden = params["w1"].shape[1]

    x = state.reshape(batch * seq, input_dim)
    f1 = x @ params["w1"] + params["b1"]
    f1 = jnp.where(f1 > 0, f1, 0.01 * f1)
    f2 = f1 @ params["w2"] + params["b2"]
    f2 = jnp.where(f2 > 0, f2, 0.01 * f2)
    feats = f2.reshape(batch, seq, hidden)

    def step(carry, x_t):
        h, c = carry
        g = x_t @ params["w_ih"] + h @ params["w_hh"] + params["b_lstm"]
        i = jax.nn.sigmoid(g[:, :hidden])
        f = jax.nn.sigmoid(g[:, hidden:2 * hidden])
        gg = jnp.tanh(g[:, 2 * hidden:3 * hidden])
        o = jax.nn.sigmoid(g[:, 3 * hidden:])
        c = f * c + i * gg
        h = o * jnp.tanh(c)
        return (h, c), h

    h0 = jnp.zeros((batch, hidden), jnp.float32)
    c0 = jnp.zeros((batch, hidden), jnp.float32)
    (h_n, c_n), hs = jax.lax.scan(step, (h0, c0), jnp.swapaxes(feats, 0, 1))
    lstm_out = jnp.swapaxes(hs, 0, 1)
    q = lstm_out.reshape(batch * seq, hidden) @ params["w_out"] + params["b_out"]
    return q.reshape(batch, seq, -1), (h_n[None], c_n[None])


# ---------------------------------------------------------------------------
if __name__ == "__main__":
    BATCH, SEQ = 2, 8
    INPUT_DIM, HIDDEN = 16, 32
    A_LEADER, A_F1, A_F2 = 3, 2, 2
    ACTION_DIM = A_LEADER * A_F1 * A_F2

    key = jax.random.PRNGKey(0)
    pkey, xkey = jax.random.split(key)
    params = init_params(pkey, INPUT_DIM, HIDDEN, ACTION_DIM)
    state = jax.random.normal(xkey, (BATCH, SEQ, INPUT_DIM), jnp.float32)

    single_buf = _buffered_specs_supported()

    fwd = jax.jit(recurrent_q_forward,
                  static_argnames=("matmul_dtype", "max_rows_per_chunk",
                                   "single_buffer_weights"))

    q_ref, (h_ref, c_ref) = _reference_forward(params, state)

    # 1) f32 matmuls, multi-chunk (t_chunk=2, grid=(4,)): exact check of the
    #    lane-padding and the chunk-to-chunk (h, c) carry.
    q1, (h1, c1) = fwd(params, state, matmul_dtype=jnp.float32,
                       max_rows_per_chunk=16, single_buffer_weights=single_buf)
    jax.block_until_ready((q1, h1, c1))
    assert q1.shape == (BATCH, SEQ, ACTION_DIM)
    assert h1.shape == (1, BATCH, HIDDEN) and c1.shape == (1, BATCH, HIDDEN)
    err1 = max(float(jnp.max(jnp.abs(q1 - q_ref))),
               float(jnp.max(jnp.abs(h1 - h_ref))),
               float(jnp.max(jnp.abs(c1 - c_ref))))
    assert err1 < 5e-3, f"f32 chunked kernel mismatch: {err1}"

    # 2) bf16 matmuls (default), auto chunk size (single chunk here).
    q2, (h2, c2) = fwd(params, state, single_buffer_weights=single_buf)
    jax.block_until_ready((q2, h2, c2))
    err2 = max(float(jnp.max(jnp.abs(q2 - q_ref))),
               float(jnp.max(jnp.abs(h2 - h_ref))),
               float(jnp.max(jnp.abs(c2 - c_ref))))
    assert err2 < 2e-2, f"bf16 kernel mismatch: {err2}"

    # 3) bf16, ragged chunking: t_chunk=3 does not divide seq=8, last chunk's
    #    padded timestep is masked out of the carried state inside the kernel.
    q3, (h3, c3) = fwd(params, state, max_rows_per_chunk=24,
                       single_buffer_weights=single_buf)
    jax.block_until_ready((q3, h3, c3))
    err3 = max(float(jnp.max(jnp.abs(q3 - q_ref))),
               float(jnp.max(jnp.abs(h3 - h_ref))),
               float(jnp.max(jnp.abs(c3 - c_ref))))
    assert err3 < 2e-2, f"ragged bf16 kernel mismatch: {err3}"

    print("KERNEL_OK")
</pallas_src>

<mosaic_0001>
module attributes {stable_mosaic.version = 11 : i64} {
  func.func @_probe(%arg0: i32, %arg1: memref<8x128xf32, #tpu.memory_space<vmem>>, %arg2: memref<8x128xf32, #tpu.memory_space<vmem>>, %arg3: memref<8x128xf32, #tpu.memory_space<vmem>>) attributes {dimension_semantics = [#tpu.dimension_semantics<arbitrary>], iteration_bounds = array<i64: 2>, scalar_prefetch = 0 : i64, scratch_operands = 0 : i64, tpu.core_type = #tpu.core_type<tc>, window_params = [{pipeline_mode = #tpu.pipeline_mode<synchronous>, transform_indices = @transform_0, window_bounds = array<i64: 8, 128>}, {transform_indices = @transform_1, window_bounds = array<i64: 8, 128>}, {transform_indices = @transform_2, window_bounds = array<i64: 8, 128>}]} {
    %c0 = arith.constant 0 : index
    %c0_0 = arith.constant 0 : index
    %0 = vector.load %arg2[%c0, %c0_0] : memref<8x128xf32, #tpu.memory_space<vmem>>, vector<8x128xf32>
    %c0_1 = arith.constant 0 : index
    %c0_2 = arith.constant 0 : index
    %1 = vector.load %arg1[%c0_1, %c0_2] : memref<8x128xf32, #tpu.memory_space<vmem>>, vector<8x128xf32>
    %2 = arith.addf %0, %1 : vector<8x128xf32>
    %c0_3 = arith.constant 0 : index
    %c0_4 = arith.constant 0 : index
    %3 = vector.load %arg3[%c0_3, %c0_4] : memref<8x128xf32, #tpu.memory_space<vmem>>, vector<8x128xf32>
    tpu.vector_store %arg3[%c0_3, %c0_4], %2 {strides = array<i32>} : memref<8x128xf32, #tpu.memory_space<vmem>>, vector<8x128xf32>,
    return
  }
  func.func @transform_0(%arg0: i32) -> (i32, i32) {
    %c0_i32 = arith.constant 0 : i32
    %c0_i32_0 = arith.constant 0 : i32
    %c0_i32_1 = arith.constant 0 : i32
    return %c0_i32, %c0_i32_0 : i32, i32
  }
  func.func @transform_1(%arg0: i32) -> (i32, i32) {
    %c0_i32 = arith.constant 0 : i32
    %c0_i32_0 = arith.constant 0 : i32
    return %arg0, %c0_i32 : i32, i32
  }
  func.func @transform_2(%arg0: i32) -> (i32, i32) {
    %c0_i32 = arith.constant 0 : i32
    %c0_i32_0 = arith.constant 0 : i32
    return %arg0, %c0_i32 : i32, i32
  }
}

module attributes {stable_mosaic.version = 11 : i64} {
  func.func @_fused_drqn_kernel(%arg0: i32, %arg1: memref<16x16xf32, #tpu.memory_space<vmem>>, %arg2: memref<8x128xf32, #tpu.memory_space<vmem>>, %arg3: memref<8x128xf32, #tpu.memory_space<vmem>>, %arg4: memref<16x128xf32, #tpu.memory_space<vmem>>, %arg5: memref<1x128xf32, #tpu.memory_space<vmem>>, %arg6: memref<128x128xf32, #tpu.memory_space<vmem>>, %arg7: memref<1x128xf32, #tpu.memory_space<vmem>>, %arg8: memref<128x512xf32, #tpu.memory_space<vmem>>, %arg9: memref<128x512xf32, #tpu.memory_space<vmem>>, %arg10: memref<1x512xf32, #tpu.memory_space<vmem>>, %arg11: memref<128x128xf32, #tpu.memory_space<vmem>>, %arg12: memref<1x128xf32, #tpu.memory_space<vmem>>, %arg13: memref<16x128xf32, #tpu.memory_space<vmem>>, %arg14: memref<8x128xf32, #tpu.memory_space<vmem>>, %arg15: memref<8x128xf32, #tpu.memory_space<vmem>>, %arg16: memref<8x128xf32, #tpu.memory_space<vmem>>, %arg17: memref<8x128xf32, #tpu.memory_space<vmem>>, %arg18: memref<16x128xf32, #tpu.memory_space<vmem>>, %arg19: memref<16x512xf32, #tpu.memory_space<vmem>>) attributes {dimension_semantics = [#tpu.dimension_semantics<arbitrary>], iteration_bounds = array<i64: 4>, scalar_prefetch = 0 : i64, scratch_operands = 4 : i64, tpu.core_type = #tpu.core_type<tc>, window_params = [{transform_indices = @transform_0, window_bounds = array<i64: 16, 16>}, {pipeline_mode = #tpu.pipeline_mode<synchronous>, transform_indices = @transform_1, window_bounds = array<i64: 8, 128>}, {pipeline_mode = #tpu.pipeline_mode<synchronous>, transform_indices = @transform_2, window_bounds = array<i64: 8, 128>}, {pipeline_mode = #tpu.pipeline_mode<synchronous>, transform_indices = @transform_3, window_bounds = array<i64: 16, 128>}, {pipeline_mode = #tpu.pipeline_mode<synchronous>, transform_indices = @transform_4, window_bounds = array<i64: 1, 128>}, {pipeline_mode = #tpu.pipeline_mode<synchronous>, transform_indices = @transform_5, window_bounds = array<i64: 128, 128>}, {pipeline_mode = #tpu.pipeline_mode<synchronous>, transform_indices = @transform_6, window_bounds = array<i64: 1, 128>}, {pipeline_mode = #tpu.pipeline_mode<synchronous>, transform_indices = @transform_7, window_bounds = array<i64: 128, 512>}, {pipeline_mode = #tpu.pipeline_mode<synchronous>, transform_indices = @transform_8, window_bounds = array<i64: 128, 512>}, {pipeline_mode = #tpu.pipeline_mode<synchronous>, transform_indices = @transform_9, window_bounds = array<i64: 1, 512>}, {pipeline_mode = #tpu.pipeline_mode<synchronous>, transform_indices = @transform_10, window_bounds = array<i64: 128, 128>}, {pipeline_mode = #tpu.pipeline_mode<synchronous>, transform_indices = @transform_11, window_bounds = array<i64: 1, 128>}, {transform_indices = @transform_12, window_bounds = array<i64: 16, 128>}, {pipeline_mode = #tpu.pipeline_mode<synchronous>, transform_indices = @transform_13, window_bounds = array<i64: 8, 128>}, {pipeline_mode = #tpu.pipeline_mode<synchronous>, transform_indices = @transform_14, window_bounds = array<i64: 8, 128>}]} {
    %c0_i32 = arith.constant 0 : i32
    %0 = arith.cmpi eq, %arg0, %c0_i32 : i32
    %1 = arith.extui %0 : i1 to i32
    %c0_i32_0 = arith.constant 0 : i32
    %2 = arith.cmpi ne, %1, %c0_i32_0 : i32
    scf.if %2 {
      %c0_58 = arith.constant 0 : index
      %c0_59 = arith.constant 0 : index
      %112 = vector.load %arg2[%c0_58, %c0_59] : memref<8x128xf32, #tpu.memory_space<vmem>>, vector<8x128xf32>
      %c0_60 = arith.constant 0 : index
      %c0_61 = arith.constant 0 : index
      %113 = vector.load %arg16[%c0_60, %c0_61] : memref<8x128xf32, #tpu.memory_space<vmem>>, vector<8x128xf32>
      tpu.vector_store %arg16[%c0_60, %c0_61], %112 {strides = array<i32>} : memref<8x128xf32, #tpu.memory_space<vmem>>, vector<8x128xf32>,
      %c0_62 = arith.constant 0 : index
      %c0_63 = arith.constant 0 : index
      %114 = vector.load %arg3[%c0_62, %c0_63] : memref<8x128xf32, #tpu.memory_space<vmem>>, vector<8x128xf32>
      %c0_64 = arith.constant 0 : index
      %c0_65 = arith.constant 0 : index
      %115 = vector.load %arg17[%c0_64, %c0_65] : memref<8x128xf32, #tpu.memory_space<vmem>>, vector<8x128xf32>
      tpu.vector_store %arg17[%c0_64, %c0_65], %114 {strides = array<i32>} : memref<8x128xf32, #tpu.memory_space<vmem>>, vector<8x128xf32>,
    } else {
    }
    %c0 = arith.constant 0 : index
    %c0_1 = arith.constant 0 : index
    %3 = vector.load %arg1[%c0, %c0_1] : memref<16x16xf32, #tpu.memory_space<vmem>>, vector<16x16xf32>
    %c0_2 = arith.constant 0 : index
    %c0_3 = arith.constant 0 : index
    %4 = vector.load %arg4[%c0_2, %c0_3] : memref<16x128xf32, #tpu.memory_space<vmem>>, vector<16x128xf32>
    %cst = arith.constant dense<0.000000e+00> : vector<16x128xf32>
    %5 = tpu.matmul %3, %4, %cst {dimension_numbers = #tpu.dot_dimension_numbers<[1], [0], [0], [1], [0, 0, 1, 1], [], []>} : vector<16x16xf32>, vector<16x128xf32>, vector<16x128xf32> -> vector<16x128xf32>
    %c0_4 = arith.constant 0 : index
    %c0_5 = arith.constant 0 : index
    %6 = vector.load %arg5[%c0_4, %c0_5] : memref<1x128xf32, #tpu.memory_space<vmem>>, vector<1x128xf32>
    %7 = vector.broadcast %6 : vector<1x128xf32> to vector<16x128xf32>
    %8 = arith.addf %5, %7 : vector<16x128xf32>
    %cst_6 = arith.constant 0.000000e+00 : f32
    %9 = vector.broadcast %cst_6 : f32 to vector<16x128xf32>
    %10 = arith.cmpf ogt, %8, %9 : vector<16x128xf32>
    %cst_7 = arith.constant 0.00999999977 : f32
    %11 = vector.broadcast %cst_7 : f32 to vector<16x128xf32>
    %12 = arith.mulf %11, %8 : vector<16x128xf32>
    %13 = arith.select %10, %8, %12 : vector<16x128xi1>, vector<16x128xf32>
    %c0_8 = arith.constant 0 : index
    %c0_9 = arith.constant 0 : index
    %14 = vector.load %arg6[%c0_8, %c0_9] : memref<128x128xf32, #tpu.memory_space<vmem>>, vector<128x128xf32>
    %cst_10 = arith.constant dense<0.000000e+00> : vector<16x128xf32>
    %15 = tpu.matmul %13, %14, %cst_10 {dimension_numbers = #tpu.dot_dimension_numbers<[1], [0], [0], [1], [0, 0, 1, 1], [], []>} : vector<16x128xf32>, vector<128x128xf32>, vector<16x128xf32> -> vector<16x128xf32>
    %c0_11 = arith.constant 0 : index
    %c0_12 = arith.constant 0 : index
    %16 = vector.load %arg7[%c0_11, %c0_12] : memref<1x128xf32, #tpu.memory_space<vmem>>, vector<1x128xf32>
    %17 = vector.broadcast %16 : vector<1x128xf32> to vector<16x128xf32>
    %18 = arith.addf %15, %17 : vector<16x128xf32>
    %cst_13 = arith.constant 0.000000e+00 : f32
    %19 = vector.broadcast %cst_13 : f32 to vector<16x128xf32>
    %20 = arith.cmpf ogt, %18, %19 : vector<16x128xf32>
    %cst_14 = arith.constant 0.00999999977 : f32
    %21 = vector.broadcast %cst_14 : f32 to vector<16x128xf32>
    %22 = arith.mulf %21, %18 : vector<16x128xf32>
    %23 = arith.select %20, %18, %22 : vector<16x128xi1>, vector<16x128xf32>
    %c0_15 = arith.constant 0 : index
    %c0_16 = arith.constant 0 : index
    %24 = vector.load %arg8[%c0_15, %c0_16] : memref<128x512xf32, #tpu.memory_space<vmem>>, vector<128x512xf32>
    %cst_17 = arith.constant dense<0.000000e+00> : vector<16x512xf32>
    %25 = tpu.matmul %23, %24, %cst_17 {dimension_numbers = #tpu.dot_dimension_numbers<[1], [0], [0], [1], [0, 0, 1, 1], [], []>} : vector<16x128xf32>, vector<128x512xf32>, vector<16x512xf32> -> vector<16x512xf32>
    %c0_18 = arith.constant 0 : index
    %c0_19 = arith.constant 0 : index
    %26 = vector.load %arg10[%c0_18, %c0_19] : memref<1x512xf32, #tpu.memory_space<vmem>>, vector<1x512xf32>
    %27 = vector.broadcast %26 : vector<1x512xf32> to vector<16x512xf32>
    %28 = arith.addf %25, %27 : vector<16x512xf32>
    %c0_20 = arith.constant 0 : index
    %c0_21 = arith.constant 0 : index
    %29 = vector.load %arg19[%c0_20, %c0_21] : memref<16x512xf32, #tpu.memory_space<vmem>>, vector<16x512xf32>
    tpu.vector_store %arg19[%c0_20, %c0_21], %28 {strides = array<i32>} : memref<16x512xf32, #tpu.memory_space<vmem>>, vector<16x512xf32>,
    %c0_22 = arith.constant 0 : index
    %c0_23 = arith.constant 0 : index
    %30 = vector.load %arg16[%c0_22, %c0_23] : memref<8x128xf32, #tpu.memory_space<vmem>>, vector<8x128xf32>
    %c0_24 = arith.constant 0 : index
    %c0_25 = arith.constant 0 : index
    %31 = vector.load %arg17[%c0_24, %c0_25] : memref<8x128xf32, #tpu.memory_space<vmem>>, vector<8x128xf32>
    %c0_i32_26 = arith.constant 0 : i32
    %c8_i32 = arith.constant 8 : i32
    %32 = arith.muli %c0_i32_26, %c8_i32 : i32
    %33 = tpu.assume_multiple %32, 8 : i32
    %34 = arith.index_cast %33 : i32 to index
    %c0_27 = arith.constant 0 : index
    %35 = vector.load %arg19[%34, %c0_27] : memref<16x512xf32, #tpu.memory_space<vmem>>, vector<8x512xf32>
    %c0_28 = arith.constant 0 : index
    %c0_29 = arith.constant 0 : index
    %36 = vector.load %arg9[%c0_28, %c0_29] : memref<128x512xf32, #tpu.memory_space<vmem>>, vector<128x512xf32>
    %cst_30 = arith.constant dense<0.000000e+00> : vector<8x512xf32>
    %37 = tpu.matmul %30, %36, %cst_30 {dimension_numbers = #tpu.dot_dimension_numbers<[1], [0], [0], [1], [0, 0, 1, 1], [], []>} : vector<8x128xf32>, vector<128x512xf32>, vector<8x512xf32> -> vector<8x512xf32>
    %38 = arith.addf %35, %37 : vector<8x512xf32>
    %39 = vector.extract_strided_slice %38 {offsets = [0, 0], sizes = [8, 128], strides = [1, 1]} : vector<8x512xf32> to vector<8x128xf32>
    %40 = arith.negf %39 : vector<8x128xf32>
    %41 = math.exp %40 : vector<8x128xf32>
    %cst_31 = arith.constant 1.000000e+00 : f32
    %42 = vector.broadcast %cst_31 : f32 to vector<8x128xf32>
    %43 = arith.addf %42, %41 : vector<8x128xf32>
    %44 = arith.divf %42, %43 : vector<8x128xf32>
    %45 = vector.extract_strided_slice %38 {offsets = [0, 128], sizes = [8, 128], strides = [1, 1]} : vector<8x512xf32> to vector<8x128xf32>
    %46 = arith.negf %45 : vector<8x128xf32>
    %47 = math.exp %46 : vector<8x128xf32>
    %cst_32 = arith.constant 1.000000e+00 : f32
    %48 = vector.broadcast %cst_32 : f32 to vector<8x128xf32>
    %49 = arith.addf %48, %47 : vector<8x128xf32>
    %50 = arith.divf %48, %49 : vector<8x128xf32>
    %51 = vector.extract_strided_slice %38 {offsets = [0, 256], sizes = [8, 128], strides = [1, 1]} : vector<8x512xf32> to vector<8x128xf32>
    %52 = math.tanh %51 : vector<8x128xf32>
    %53 = vector.extract_strided_slice %38 {offsets = [0, 384], sizes = [8, 128], strides = [1, 1]} : vector<8x512xf32> to vector<8x128xf32>
    %54 = arith.negf %53 : vector<8x128xf32>
    %55 = math.exp %54 : vector<8x128xf32>
    %cst_33 = arith.constant 1.000000e+00 : f32
    %56 = vector.broadcast %cst_33 : f32 to vector<8x128xf32>
    %57 = arith.addf %56, %55 : vector<8x128xf32>
    %58 = arith.divf %56, %57 : vector<8x128xf32>
    %59 = arith.mulf %50, %31 : vector<8x128xf32>
    %60 = arith.mulf %44, %52 : vector<8x128xf32>
    %61 = arith.addf %59, %60 : vector<8x128xf32>
    %62 = math.tanh %61 : vector<8x128xf32>
    %63 = arith.mulf %58, %62 : vector<8x128xf32>
    %64 = arith.index_cast %33 : i32 to index
    %c0_34 = arith.constant 0 : index
    %65 = vector.load %arg18[%64, %c0_34] : memref<16x128xf32, #tpu.memory_space<vmem>>, vector<8x128xf32>
    tpu.vector_store %arg18[%64, %c0_34], %63 {strides = array<i32>} : memref<16x128xf32, #tpu.memory_space<vmem>>, vector<8x128xf32>,
    %c1_i32 = arith.constant 1 : i32
    %c8_i32_35 = arith.constant 8 : i32
    %66 = arith.muli %c1_i32, %c8_i32_35 : i32
    %67 = tpu.assume_multiple %66, 8 : i32
    %68 = arith.index_cast %67 : i32 to index
    %c0_36 = arith.constant 0 : index
    %69 = vector.load %arg19[%68, %c0_36] : memref<16x512xf32, #tpu.memory_space<vmem>>, vector<8x512xf32>
    %c0_37 = arith.constant 0 : index
    %c0_38 = arith.constant 0 : index
    %70 = vector.load %arg9[%c0_37, %c0_38] : memref<128x512xf32, #tpu.memory_space<vmem>>, vector<128x512xf32>
    %cst_39 = arith.constant dense<0.000000e+00> : vector<8x512xf32>
    %71 = tpu.matmul %63, %70, %cst_39 {dimension_numbers = #tpu.dot_dimension_numbers<[1], [0], [0], [1], [0, 0, 1, 1], [], []>} : vector<8x128xf32>, vector<128x512xf32>, vector<8x512xf32> -> vector<8x512xf32>
    %72 = arith.addf %69, %71 : vector<8x512xf32>
    %73 = vector.extract_strided_slice %72 {offsets = [0, 0], sizes = [8, 128], strides = [1, 1]} : vector<8x512xf32> to vector<8x128xf32>
    %74 = arith.negf %73 : vector<8x128xf32>
    %75 = math.exp %74 : vector<8x128xf32>
    %cst_40 = arith.constant 1.000000e+00 : f32
    %76 = vector.broadcast %cst_40 : f32 to vector<8x128xf32>
    %77 = arith.addf %76, %75 : vector<8x128xf32>
    %78 = arith.divf %76, %77 : vector<8x128xf32>
    %79 = vector.extract_strided_slice %72 {offsets = [0, 128], sizes = [8, 128], strides = [1, 1]} : vector<8x512xf32> to vector<8x128xf32>
    %80 = arith.negf %79 : vector<8x128xf32>
    %81 = math.exp %80 : vector<8x128xf32>
    %cst_41 = arith.constant 1.000000e+00 : f32
    %82 = vector.broadcast %cst_41 : f32 to vector<8x128xf32>
    %83 = arith.addf %82, %81 : vector<8x128xf32>
    %84 = arith.divf %82, %83 : vector<8x128xf32>
    %85 = vector.extract_strided_slice %72 {offsets = [0, 256], sizes = [8, 128], strides = [1, 1]} : vector<8x512xf32> to vector<8x128xf32>
    %86 = math.tanh %85 : vector<8x128xf32>
    %87 = vector.extract_strided_slice %72 {offsets = [0, 384], sizes = [8, 128], strides = [1, 1]} : vector<8x512xf32> to vector<8x128xf32>
    %88 = arith.negf %87 : vector<8x128xf32>
    %89 = math.exp %88 : vector<8x128xf32>
    %cst_42 = arith.constant 1.000000e+00 : f32
    %90 = vector.broadcast %cst_42 : f32 to vector<8x128xf32>
    %91 = arith.addf %90, %89 : vector<8x128xf32>
    %92 = arith.divf %90, %91 : vector<8x128xf32>
    %93 = arith.mulf %84, %61 : vector<8x128xf32>
    %94 = arith.mulf %78, %86 : vector<8x128xf32>
    %95 = arith.addf %93, %94 : vector<8x128xf32>
    %96 = math.tanh %95 : vector<8x128xf32>
    %97 = arith.mulf %92, %96 : vector<8x128xf32>
    %98 = arith.index_cast %67 : i32 to index
    %c0_43 = arith.constant 0 : index
    %99 = vector.load %arg18[%98, %c0_43] : memref<16x128xf32, #tpu.memory_space<vmem>>, vector<8x128xf32>
    tpu.vector_store %arg18[%98, %c0_43], %97 {strides = array<i32>} : memref<16x128xf32, #tpu.memory_space<vmem>>, vector<8x128xf32>,
    %c2_i32 = arith.constant 2 : i32
    %c0_44 = arith.constant 0 : index
    %c0_45 = arith.constant 0 : index
    %100 = vector.load %arg16[%c0_44, %c0_45] : memref<8x128xf32, #tpu.memory_space<vmem>>, vector<8x128xf32>
    tpu.vector_store %arg16[%c0_44, %c0_45], %97 {strides = array<i32>} : memref<8x128xf32, #tpu.memory_space<vmem>>, vector<8x128xf32>,
    %c0_46 = arith.constant 0 : index
    %c0_47 = arith.constant 0 : index
    %101 = vector.load %arg17[%c0_46, %c0_47] : memref<8x128xf32, #tpu.memory_space<vmem>>, vector<8x128xf32>
    tpu.vector_store %arg17[%c0_46, %c0_47], %95 {strides = array<i32>} : memref<8x128xf32, #tpu.memory_space<vmem>>, vector<8x128xf32>,
    %c0_48 = arith.constant 0 : index
    %c0_49 = arith.constant 0 : index
    %102 = vector.load %arg18[%c0_48, %c0_49] : memref<16x128xf32, #tpu.memory_space<vmem>>, vector<16x128xf32>
    %c0_50 = arith.constant 0 : index
    %c0_51 = arith.constant 0 : index
    %103 = vector.load %arg11[%c0_50, %c0_51] : memref<128x128xf32, #tpu.memory_space<vmem>>, vector<128x128xf32>
    %cst_52 = arith.constant dense<0.000000e+00> : vector<16x128xf32>
    %104 = tpu.matmul %102, %103, %cst_52 {dimension_numbers = #tpu.dot_dimension_numbers<[1], [0], [0], [1], [0, 0, 1, 1], [], []>} : vector<16x128xf32>, vector<128x128xf32>, vector<16x128xf32> -> vector<16x128xf32>
    %c0_53 = arith.constant 0 : index
    %c0_54 = arith.constant 0 : index
    %105 = vector.load %arg12[%c0_53, %c0_54] : memref<1x128xf32, #tpu.memory_space<vmem>>, vector<1x128xf32>
    %106 = vector.broadcast %105 : vector<1x128xf32> to vector<16x128xf32>
    %107 = arith.addf %104, %106 : vector<16x128xf32>
    %c0_55 = arith.constant 0 : index
    %c0_56 = arith.constant 0 : index
    %108 = vector.load %arg13[%c0_55, %c0_56] : memref<16x128xf32, #tpu.memory_space<vmem>>, vector<16x128xf32>
    tpu.vector_store %arg13[%c0_55, %c0_56], %107 {strides = array<i32>} : memref<16x128xf32, #tpu.memory_space<vmem>>, vector<16x128xf32>,
    %c3_i32 = arith.constant 3 : i32
    %109 = arith.cmpi eq, %arg0, %c3_i32 : i32
    %110 = arith.extui %109 : i1 to i32
    %c0_i32_57 = arith.constant 0 : i32
    %111 = arith.cmpi ne, %110, %c0_i32_57 : i32
    scf.if %111 {
      %c0_58 = arith.constant 0 : index
      %c0_59 = arith.constant 0 : index
      %112 = vector.load %arg16[%c0_58, %c0_59] : memref<8x128xf32, #tpu.memory_space<vmem>>, vector<8x128xf32>
      %c0_60 = arith.constant 0 : index
      %c0_61 = arith.constant 0 : index
      %113 = vector.load %arg14[%c0_60, %c0_61] : memref<8x128xf32, #tpu.memory_space<vmem>>, vector<8x128xf32>
      tpu.vector_store %arg14[%c0_60, %c0_61], %112 {strides = array<i32>} : memref<8x128xf32, #tpu.memory_space<vmem>>, vector<8x128xf32>,
      %c0_62 = arith.constant 0 : index
      %c0_63 = arith.constant 0 : index
      %114 = vector.load %arg17[%c0_62, %c0_63] : memref<8x128xf32, #tpu.memory_space<vmem>>, vector<8x128xf32>
      %c0_64 = arith.constant 0 : index
      %c0_65 = arith.constant 0 : index
      %115 = vector.load %arg15[%c0_64, %c0_65] : memref<8x128xf32, #tpu.memory_space<vmem>>, vector<8x128xf32>
      tpu.vector_store %arg15[%c0_64, %c0_65], %114 {strides = array<i32>} : memref<8x128xf32, #tpu.memory_space<vmem>>, vector<8x128xf32>,
    } else {
    }
    return
  }
  func.func @transform_0(%arg0: i32) -> (i32, i32) {
    %c0_i32 = arith.constant 0 : i32
    %c0_i32_0 = arith.constant 0 : i32
    return %arg0, %c0_i32 : i32, i32
  }
  func.func @transform_1(%arg0: i32) -> (i32, i32) {
    %c0_i32 = arith.constant 0 : i32
    %c0_i32_0 = arith.constant 0 : i32
    %c0_i32_1 = arith.constant 0 : i32
    return %c0_i32, %c0_i32_0 : i32, i32
  }
  func.func @transform_2(%arg0: i32) -> (i32, i32) {
    %c0_i32 = arith.constant 0 : i32
    %c0_i32_0 = arith.constant 0 : i32
    %c0_i32_1 = arith.constant 0 : i32
    return %c0_i32, %c0_i32_0 : i32, i32
  }
  func.func @transform_3(%arg0: i32) -> (i32, i32) {
    %c0_i32 = arith.constant 0 : i32
    %c0_i32_0 = arith.constant 0 : i32
    %c0_i32_1 = arith.constant 0 : i32
    return %c0_i32, %c0_i32_0 : i32, i32
  }
  func.func @transform_4(%arg0: i32) -> (i32, i32) {
    %c0_i32 = arith.constant 0 : i32
    %c0_i32_0 = arith.constant 0 : i32
    %c0_i32_1 = arith.constant 0 : i32
    return %c0_i32, %c0_i32_0 : i32, i32
  }
  func.func @transform_5(%arg0: i32) -> (i32, i32) {
    %c0_i32 = arith.constant 0 : i32
    %c0_i32_0 = arith.constant 0 : i32
    %c0_i32_1 = arith.constant 0 : i32
    return %c0_i32, %c0_i32_0 : i32, i32
  }
  func.func @transform_6(%arg0: i32) -> (i32, i32) {
    %c0_i32 = arith.constant 0 : i32
    %c0_i32_0 = arith.constant 0 : i32
    %c0_i32_1 = arith.constant 0 : i32
    return %c0_i32, %c0_i32_0 : i32, i32
  }
  func.func @transform_7(%arg0: i32) -> (i32, i32) {
    %c0_i32 = arith.constant 0 : i32
    %c0_i32_0 = arith.constant 0 : i32
    %c0_i32_1 = arith.constant 0 : i32
    return %c0_i32, %c0_i32_0 : i32, i32
  }
  func.func @transform_8(%arg0: i32) -> (i32, i32) {
    %c0_i32 = arith.constant 0 : i32
    %c0_i32_0 = arith.constant 0 : i32
    %c0_i32_1 = arith.constant 0 : i32
    return %c0_i32, %c0_i32_0 : i32, i32
  }
  func.func @transform_9(%arg0: i32) -> (i32, i32) {
    %c0_i32 = arith.constant 0 : i32
    %c0_i32_0 = arith.constant 0 : i32
    %c0_i32_1 = arith.constant 0 : i32
    return %c0_i32, %c0_i32_0 : i32, i32
  }
  func.func @transform_10(%arg0: i32) -> (i32, i32) {
    %c0_i32 = arith.constant 0 : i32
    %c0_i32_0 = arith.constant 0 : i32
    %c0_i32_1 = arith.constant 0 : i32
    return %c0_i32, %c0_i32_0 : i32, i32
  }
  func.func @transform_11(%arg0: i32) -> (i32, i32) {
    %c0_i32 = arith.constant 0 : i32
    %c0_i32_0 = arith.constant 0 : i32
    %c0_i32_1 = arith.constant 0 : i32
    return %c0_i32, %c0_i32_0 : i32, i32
  }
  func.func @transform_12(%arg0: i32) -> (i32, i32) {
    %c0_i32 = arith.constant 0 : i32
    %c0_i32_0 = arith.constant 0 : i32
    return %arg0, %c0_i32 : i32, i32
  }
  func.func @transform_13(%arg0: i32) -> (i32, i32) {
    %c0_i32 = arith.constant 0 : i32
    %c0_i32_0 = arith.constant 0 : i32
    %c0_i32_1 = arith.constant 0 : i32
    return %c0_i32, %c0_i32_0 : i32, i32
  }
  func.func @transform_14(%arg0: i32) -> (i32, i32) {
    %c0_i32 = arith.constant 0 : i32
    %c0_i32_0 = arith.constant 0 : i32
    %c0_i32_1 = arith.constant 0 : i32
    return %c0_i32, %c0_i32_0 : i32, i32
  }
}

</mosaic_0001>

<llo_original>
// kernel: tpu_custom_call.1
$region0: #{tpu_custom_call.1}
  #allocation0 [shape = 'u32[]', space=smem, size = 0x4, offset = 0x4, fixed_abs, tag = 'smem constant byte address 0x4 - core index']
  #allocation1 [shape = 'u32[144,128]{1,0:T(1,128)}', space=vmem, size = 0x12000, scoped, tag = 'internal scratch']
  %s0 = inlined_call_operand.hbm [shape: f32[8,128], index: 0, kind: input, shape index: {}]
  %s1 = inlined_call_operand.hbm [shape: f32[16,128], index: 1, kind: input, shape index: {}]
  %s2 = inlined_call_operand.hbm [shape: f32[16,128], index: 2, kind: output, shape index: {}]
  %s3 = sld [smem:[#allocation0]]
  $region49: #{tpu_custom_call.1} parent=0
    _
  %s5 = ssub.s32 1, %s3
  %s6 = scalar_select 0, %s5, %s3
  $region1: #{tpu_custom_call.1} parent=0
    #allocation2 [shape = 'u8[4096]{0}', space=vmem, size = 0x1000, scoped, tag = 'input window, operand 0, single buffered']
    #allocation3 [shape = 's32[2]{0}', space=sflag, size = 0x8, scoped, tag = 'scoped memory for tpu_custom_call.1']
    #allocation4 [shape = 's32[2]{0}', space=sflag, size = 0x8, scoped, tag = 'scoped memory for tpu_custom_call.1']
    #allocation5 [shape = 'u8[8192]{0}', space=vmem, size = 0x2000, scoped, tag = 'input window, operand 1']
    #allocation6 [shape = 's32[2]{0}', space=sflag, size = 0x8, scoped, tag = 'scoped memory for tpu_custom_call.1']
    #allocation7 [shape = 'u8[8192]{0}', space=vmem, size = 0x2000, scoped, tag = 'output window, operand 0']
    %7 = vsyncpa [#allocation3], 0
    %8 = vsyncpa [#allocation6], 0
    %s9 = scalar_lea.sflag [#allocation6], 1
    %10 = vsyncpa %s9, 0
    %11 = vsyncpa [#allocation4], 0
    %s12 = scalar_lea.sflag [#allocation4], 1
    %13 = vsyncpa %s12, 0
    loop: start=0, step=1, limit=4
    $region2: #{tpu_custom_call.1} parent=1 // loop_pre_header
      _
    $region3: #{tpu_custom_call.1} parent=1 // loop_header
      %s15 = sphi 0, %s19
      %p16 = scmp.ge.s32.totalorder %s15, 4
      %s23 = sphi 0, %s23
      %s25 = sphi 0, %s23
      %s26 = sphi 0, %s25
      %s40 = sphi 0, %s26
      %s46 = sphi 0, %s48
      %s49 = sphi 0, %s46
      %s50 = sphi 0, %s49
      %s66 = sphi 0, %s50
      %s72 = sphi 0, %s74
      %s75 = sphi 0, %s72
      %s76 = sphi 0, %s75
      %s92 = sphi 0, %s76
    $region4: #{tpu_custom_call.1} parent=1 // loop_header_branch
      %18 = sbr.rel (%p16) target = $region8
    $region5: #{tpu_custom_call.1} parent=1 // loop_body
      %s20 = ssub.s32 %s15, 1
      %s21 = ssub.s32 %s15, 2
      %s22 = sadd.s32 %s15, 1
      %s24 = sadd.s32 %s23, 1
      %p27 = scmp.eq.s32.totalorder %s15, 1
      %p28 = scmp.ne.s32.totalorder %s23, %s25
      %p29 = scmp.eq.s32.totalorder %s15, 0
      %p30 = por %p28, %p29
      %p31 = scmp.ne.s32.totalorder %s23, %s25
      %p32 = scmp.eq.s32.totalorder %s20, 1
      %p33 = por %p31, %p32
      %p34 = scmp.ne.s32.totalorder %s25, %s26
      %p35 = scmp.eq.s32.totalorder %s20, 0
      %p36 = por %p34, %p35
      %p37 = scmp.ne.s32.totalorder %s25, %s26
      %p38 = scmp.eq.s32.totalorder %s21, 1
      %p39 = por %p37, %p38
      %p41 = scmp.ne.s32.totalorder %s26, %s40
      %p42 = scmp.eq.s32.totalorder %s21, 0
      %p43 = por %p41, %p42
      %s44 = ssub.s32 %s15, %s22
      %p45 = scmp.eq.s32.totalorder %s44, 0
      %s47 = sadd.s32 %s46, 1
      %s48 = scalar_select %p45, %s46, %s47
      %p51 = pneg %p45
      %p52 = scmp.eq.s32.totalorder %s15, 1
      %p53 = por %p51, %p52
      %p54 = scmp.ne.s32.totalorder %s46, %s49
      %p55 = scmp.eq.s32.totalorder %s15, 0
      %p56 = por %p54, %p55
      %p57 = scmp.ne.s32.totalorder %s46, %s49
      %p58 = scmp.eq.s32.totalorder %s20, 1
      %p59 = por %p57, %p58
      %p60 = scmp.ne.s32.totalorder %s49, %s50
      %p61 = scmp.eq.s32.totalorder %s20, 0
      %p62 = por %p60, %p61
      %p63 = scmp.ne.s32.totalorder %s49, %s50
      %p64 = scmp.eq.s32.totalorder %s21, 1
      %p65 = por %p63, %p64
      %p67 = scmp.ne.s32.totalorder %s50, %s66
      %p68 = scmp.eq.s32.totalorder %s21, 0
      %p69 = por %p67, %p68
      %s70 = ssub.s32 %s15, %s22
      %p71 = scmp.eq.s32.totalorder %s70, 0
      %s73 = sadd.s32 %s72, 1
      %s74 = scalar_select %p71, %s72, %s73
      %p77 = pneg %p71
      %p78 = scmp.eq.s32.totalorder %s15, 1
      %p79 = por %p77, %p78
      %p80 = scmp.ne.s32.totalorder %s72, %s75
      %p81 = scmp.eq.s32.totalorder %s15, 0
      %p82 = por %p80, %p81
      %p83 = scmp.ne.s32.totalorder %s72, %s75
      %p84 = scmp.eq.s32.totalorder %s20, 1
      %p85 = por %p83, %p84
      %p86 = scmp.ne.s32.totalorder %s75, %s76
      %p87 = scmp.eq.s32.totalorder %s20, 0
      %p88 = por %p86, %p87
      %p89 = scmp.ne.s32.totalorder %s75, %s76
      %p90 = scmp.eq.s32.totalorder %s21, 1
      %p91 = por %p89, %p90
      %p93 = scmp.ne.s32.totalorder %s76, %s92
      %p94 = scmp.eq.s32.totalorder %s21, 0
      %p95 = por %p93, %p94
      %p96 = scmp.le.s32.totalorder 1, %s15
      %p97 = scmp.lt.s32.totalorder %s15, 3
      %p98 = pnand %p96, %p97
      %p99 = pneg %p98
      // Predicated region
      $region9: #{tpu_custom_call.1} parent=5 // pred_check
        _
      $region10: #{tpu_custom_call.1} parent=5 // pred_check_branch
        %101 = sbr.rel (%p98) target = $region12
      $region11: #{tpu_custom_call.1} parent=5 // pred_region
        %s102 = ssub.s32 %s15, 1
        // Predicated region
        $region13: #{tpu_custom_call.1} parent=11 // pred_check
          %p103 = pneg %p36
        $region14: #{tpu_custom_call.1} parent=11 // pred_check_branch
          %105 = sbr.rel (%p103) target = $region16
        $region15: #{tpu_custom_call.1} parent=11 // pred_region
          %s107 = ssub.s32 128, 128
          %108 = vsyncadd [#allocation3], %s107
          %s110 = sshll.u32 [#allocation2], 4
          %s111 = int_to_ptr.vmem [resolvable:$true] %s110
          %113 = dma.hbm_to_vmem [thread:$0]  %s0, 128, %s111, [#allocation3]
        $region16: #{tpu_custom_call.1} parent=11 // pred_fallthru
          _
      $region12: #{tpu_custom_call.1} parent=5 // pred_fallthru
        _
      %p114 = scmp.lt.s32.totalorder %s15, 2
      // Predicated region
      $region17: #{tpu_custom_call.1} parent=5 // pred_check
        %p115 = pneg %p114
      $region18: #{tpu_custom_call.1} parent=5 // pred_check_branch
        %117 = sbr.rel (%p115) target = $region20
      $region19: #{tpu_custom_call.1} parent=5 // pred_region
        // Predicated region
        $region21: #{tpu_custom_call.1} parent=19 // pred_check
          %p118 = pneg %p56
        $region22: #{tpu_custom_call.1} parent=19 // pred_check_branch
          %120 = sbr.rel (%p118) target = $region24
        $region23: #{tpu_custom_call.1} parent=19 // pred_region
          %s121 = sand.u32 %s46, 1
          %s122 = scalar_lea.sflag [#allocation6], %s121
          %s123 = sand.u32 %s46, 1
          %s124 = smul.addr %s123, 8
          %s125 = scalar_lea.vmem [#allocation5], %s124
          %s127 = ssub.s32 128, 128
          %128 = vsyncadd %s122, %s127
          %s129 = smul.addr %s15, 128
          %s130 = scalar_lea.hbm %s1, %s129
          %s132 = sshll.u32 %s125, 4
          %s133 = int_to_ptr.vmem [resolvable:$true] %s132
          %135 = dma.hbm_to_vmem [thread:$0]  %s130, 128, %s133, %s122
        $region24: #{tpu_custom_call.1} parent=19 // pred_fallthru
          _
      $region20: #{tpu_custom_call.1} parent=5 // pred_fallthru
        _
      %p136 = scmp.le.s32.totalorder 1, %s15
      %p137 = scmp.lt.s32.totalorder %s15, 3
      %p138 = pnand %p136, %p137
      %p139 = pneg %p138
      // Predicated region
      $region25: #{tpu_custom_call.1} parent=5 // pred_check
        _
      $region26: #{tpu_custom_call.1} parent=5 // pred_check_branch
        %141 = sbr.rel (%p138) target = $region28
      $region27: #{tpu_custom_call.1} parent=5 // pred_region
        %s142 = ssub.s32 %s15, 1
        // Predicated region
        $region29: #{tpu_custom_call.1} parent=27 // pred_check
          %p143 = pneg %p36
        $region30: #{tpu_custom_call.1} parent=27 // pred_check_branch
          %145 = sbr.rel (%p143) target = $region32
        $region31: #{tpu_custom_call.1} parent=27 // pred_region
          %146 = dma.done [#allocation3], 128
        $region32: #{tpu_custom_call.1} parent=27 // pred_fallthru
          _
        %s147 = sand.u32 %s49, 1
        %s148 = scalar_lea.sflag [#allocation6], %s147
        %s149 = sand.u32 %s49, 1
        %s150 = smul.addr %s149, 8
        %s151 = scalar_lea.vmem [#allocation5], %s150
        // Predicated region
        $region33: #{tpu_custom_call.1} parent=27 // pred_check
          %p152 = pneg %p62
        $region34: #{tpu_custom_call.1} parent=27 // pred_check_branch
          %154 = sbr.rel (%p152) target = $region36
        $region35: #{tpu_custom_call.1} parent=27 // pred_region
          %155 = dma.done %s148, 128
        $region36: #{tpu_custom_call.1} parent=27 // pred_fallthru
          _
        %p156 = pneg %p36
        %p157 = pneg %p33
        %s158 = sand.u32 %s49, 1
        %s159 = scalar_lea.sflag [#allocation6], %s158
        %s160 = sand.u32 %s49, 1
        %s161 = smul.addr %s160, 8
        %s162 = scalar_lea.vmem [#allocation5], %s161
        %p163 = pneg %p62
        %p164 = pneg %p59
        %p165 = pneg %p88
        %p166 = pneg %p85
        %s167 = sand.u32 %s75, 1
        %s168 = scalar_lea.sflag [#allocation4], %s167
        %s169 = sand.u32 %s75, 1
        %s170 = smul.addr %s169, 8
        %s171 = scalar_lea.vmem [#allocation7], %s170
        %v172 = vld [vmem:[%s151] sm:$0xff]
        %v173 = vld [vmem:[#allocation2] sm:$0xff]
        %v174 = vadd.f32 %v172, %v173
        %175 = vst [vmem:[%s171] sm:$0xff] %v174
        %s176 = sand.u32 %s75, 1
        %s177 = scalar_lea.sflag [#allocation4], %s176
        %s178 = sand.u32 %s75, 1
        %s179 = smul.addr %s178, 8
        %s180 = scalar_lea.vmem [#allocation7], %s179
        // Predicated region
        $region37: #{tpu_custom_call.1} parent=27 // pred_check
          %p181 = pneg %p85
        $region38: #{tpu_custom_call.1} parent=27 // pred_check_branch
          %183 = sbr.rel (%p181) target = $region40
        $region39: #{tpu_custom_call.1} parent=27 // pred_region
          %s185 = ssub.s32 128, 128
          %186 = vsyncadd %s177, %s185
          %s187 = smul.addr %s20, 128
          %s188 = scalar_lea.hbm %s2, %s187
          %s190 = sshll.u32 %s180, 4
          %s191 = int_to_ptr.vmem [resolvable:$true] %s190
          %193 = dma.vmem_to_hbm [thread:$0]  %s191, 128, %s188, %s177
        $region40: #{tpu_custom_call.1} parent=27 // pred_fallthru
          _
      $region28: #{tpu_custom_call.1} parent=5 // pred_fallthru
        _
      %p194 = scmp.le.s32.totalorder 2, %s15
      // Predicated region
      $region41: #{tpu_custom_call.1} parent=5 // pred_check
        %p195 = pneg %p194
      $region42: #{tpu_custom_call.1} parent=5 // pred_check_branch
        %197 = sbr.rel (%p195) target = $region44
      $region43: #{tpu_custom_call.1} parent=5 // pred_region
        %s198 = ssub.s32 %s15, 2
        // Predicated region
        $region45: #{tpu_custom_call.1} parent=43 // pred_check
          %p199 = pneg %p91
        $region46: #{tpu_custom_call.1} parent=43 // pred_check_branch
          %201 = sbr.rel (%p199) target = $region48
        $region47: #{tpu_custom_call.1} parent=43 // pred_region
          %s202 = sand.u32 %s76, 1
          %s203 = scalar_lea.sflag [#allocation4], %s202
          %s204 = sand.u32 %s76, 1
          %s205 = smul.addr %s204, 8
          %s206 = scalar_lea.vmem [#allocation7], %s205
          %207 = dma.done %s203, 128
        $region48: #{tpu_custom_call.1} parent=43 // pred_fallthru
          _
      $region44: #{tpu_custom_call.1} parent=5 // pred_fallthru
        _
    $region6: #{tpu_custom_call.1} parent=1 // loop_footer
      %s19 = sadd.s32 1, %s15
    $region7: #{tpu_custom_call.1} parent=1 // loop_footer_branch
      %14 = sbr.rel target = $region3
    $region8: #{tpu_custom_call.1} parent=1 // loop_exit
      _
    %208 = vsyncpa [#allocation3], 1
    %s209 = scalar_lea.sflag [#allocation3], 1
    %210 = vsyncpa %s209, 1
    %211 = vsyncpa [#allocation6], 1
    %s212 = scalar_lea.sflag [#allocation6], 1
    %213 = vsyncpa %s212, 1
    %214 = vsyncpa [#allocation4], 1
    %s215 = scalar_lea.sflag [#allocation4], 1
    %216 = vsyncpa %s215, 1

// kernel: recurrent_q_forward.1
$region0: #{recurrent_q_forward.1}
  #allocation0 [shape = 'u32[]', space=smem, size = 0x4, offset = 0x4, fixed_abs, tag = 'smem constant byte address 0x4 - core index']
  #allocation1 [shape = 'u32[144,128]{1,0:T(1,128)}', space=vmem, size = 0x12000, scoped, tag = 'internal scratch']
  #allocation2 [shape = 'f32[8,128]{1,0:T(8,128)}', space=vmem, size = 0x1000, scoped, tag = 'scratch operand']
  #allocation3 [shape = 'f32[8,128]{1,0:T(8,128)}', space=vmem, size = 0x1000, scoped, tag = 'scratch operand']
  #allocation4 [shape = 'f32[16,128]{1,0:T(8,128)}', space=vmem, size = 0x2000, scoped, tag = 'scratch operand']
  #allocation5 [shape = 'f32[16,512]{1,0:T(8,128)}', space=vmem, size = 0x8000, scoped, tag = 'scratch operand']
  %s0 = inlined_call_operand.vmem [shape: f32[64,16], index: 0, kind: input, shape index: {}]
  %s1 = inlined_call_operand.vmem [shape: f32[8,128], index: 1, kind: input, shape index: {}, may-alias: {1,2}]
  %s2 = inlined_call_operand.vmem [shape: f32[8,128], index: 2, kind: input, shape index: {}, may-alias: {1,2}]
  %s3 = inlined_call_operand.vmem [shape: f32[16,128], index: 3, kind: input, shape index: {}]
  %s4 = inlined_call_operand.vmem [shape: f32[1,128], index: 4, kind: input, shape index: {}]
  %s5 = inlined_call_operand.vmem [shape: f32[128,128], index: 5, kind: input, shape index: {}]
  %s6 = inlined_call_operand.vmem [shape: f32[1,128], index: 6, kind: input, shape index: {}]
  %s7 = inlined_call_operand.vmem [shape: f32[128,512], index: 7, kind: input, shape index: {}]
  %s8 = inlined_call_operand.vmem [shape: f32[128,512], index: 8, kind: input, shape index: {}]
  %s9 = inlined_call_operand.vmem [shape: f32[1,512], index: 9, kind: input, shape index: {}]
  %s10 = inlined_call_operand.vmem [shape: f32[128,128], index: 10, kind: input, shape index: {}]
  %s11 = inlined_call_operand.vmem [shape: f32[1,128], index: 11, kind: input, shape index: {}]
  %s12 = inlined_call_operand.vmem [shape: f32[64,128], index: 12, kind: output, shape index: {0}]
  %s13 = inlined_call_operand.vmem [shape: f32[8,128], index: 13, kind: output, shape index: {1}]
  %s14 = inlined_call_operand.vmem [shape: f32[8,128], index: 14, kind: output, shape index: {2}]
  %15 = xla_tuple %s12, %s13, %s14
  %s16 = sld [smem:[#allocation0]]
  $region105: #{recurrent_q_forward.1} parent=0
    _
  %s18 = ssub.s32 1, %s16
  %s19 = scalar_select 0, %s18, %s16
  loop: start=0, step=1, limit=6
  $region2: #{recurrent_q_forward.1} parent=0 // loop_pre_header
    _
  $region3: #{recurrent_q_forward.1} parent=0 // loop_header
    %s21 = sphi 0, %s25
    %p22 = scmp.ge.s32.totalorder %s21, 6
    %s31 = sphi 0, %s33
    %s34 = sphi 0, %s31
    %s35 = sphi 0, %s34
    %s51 = sphi 0, %s35
    %s55 = sphi 0, %s55
    %s57 = sphi 0, %s55
    %s58 = sphi 0, %s57
    %s72 = sphi 0, %s58
    %s76 = sphi 0, %s76
    %s78 = sphi 0, %s76
    %s79 = sphi 0, %s78
    %s93 = sphi 0, %s79
    %s97 = sphi 0, %s97
    %s99 = sphi 0, %s97
    %s100 = sphi 0, %s99
    %s114 = sphi 0, %s100
    %s118 = sphi 0, %s118
    %s120 = sphi 0, %s118
    %s121 = sphi 0, %s120
    %s135 = sphi 0, %s121
    %s139 = sphi 0, %s139
    %s141 = sphi 0, %s139
    %s142 = sphi 0, %s141
    %s156 = sphi 0, %s142
    %s160 = sphi 0, %s160
    %s162 = sphi 0, %s160
    %s163 = sphi 0, %s162
    %s177 = sphi 0, %s163
    %s181 = sphi 0, %s181
    %s183 = sphi 0, %s181
    %s184 = sphi 0, %s183
    %s198 = sphi 0, %s184
    %s202 = sphi 0, %s202
    %s204 = sphi 0, %s202
    %s205 = sphi 0, %s204
    %s219 = sphi 0, %s205
    %s223 = sphi 0, %s223
    %s225 = sphi 0, %s223
    %s226 = sphi 0, %s225
    %s240 = sphi 0, %s226
    %s244 = sphi 0, %s244
    %s246 = sphi 0, %s244
    %s247 = sphi 0, %s246
    %s261 = sphi 0, %s247
    %s265 = sphi 0, %s265
    %s267 = sphi 0, %s265
    %s268 = sphi 0, %s267
    %s282 = sphi 0, %s268
    %s288 = sphi 0, %s290
    %s291 = sphi 0, %s288
    %s292 = sphi 0, %s291
    %s308 = sphi 0, %s292
    %s312 = sphi 0, %s312
    %s314 = sphi 0, %s312
    %s315 = sphi 0, %s314
    %s329 = sphi 0, %s315
    %s333 = sphi 0, %s333
    %s335 = sphi 0, %s333
    %s336 = sphi 0, %s335
    %s350 = sphi 0, %s336
  $region4: #{recurrent_q_forward.1} parent=0 // loop_header_branch
    %24 = sbr.rel (%p22) target = $region8
  $region5: #{recurrent_q_forward.1} parent=0 // loop_body
    %s26 = ssub.s32 %s21, 1
    %s27 = ssub.s32 %s21, 2
    %s28 = sadd.s32 %s21, 1
    %s29 = ssub.s32 %s21, %s28
    %p30 = scmp.eq.s32.totalorder %s29, 0
    %s32 = sadd.s32 %s31, 1
    %s33 = scalar_select %p30, %s31, %s32
    %p36 = pneg %p30
    %p37 = scmp.eq.s32.totalorder %s21, 3
    %p38 = por %p36, %p37
    %p39 = scmp.ne.s32.totalorder %s31, %s34
    %p40 = scmp.eq.s32.totalorder %s21, 0
    %p41 = por %p39, %p40
    %p42 = scmp.ne.s32.totalorder %s31, %s34
    %p43 = scmp.eq.s32.totalorder %s26, 3
    %p44 = por %p42, %p43
    %p45 = scmp.ne.s32.totalorder %s34, %s35
    %p46 = scmp.eq.s32.totalorder %s26, 0
    %p47 = por %p45, %p46
    %p48 = scmp.ne.s32.totalorder %s34, %s35
    %p49 = scmp.eq.s32.totalorder %s27, 3
    %p50 = por %p48, %p49
    %p52 = scmp.ne.s32.totalorder %s35, %s51
    %p53 = scmp.eq.s32.totalorder %s27, 0
    %p54 = por %p52, %p53
    %s56 = sadd.s32 %s55, 1
    %p59 = scmp.eq.s32.totalorder %s21, 3
    %p60 = scmp.ne.s32.totalorder %s55, %s57
    %p61 = scmp.eq.s32.totalorder %s21, 0
    %p62 = por %p60, %p61
    %p63 = scmp.ne.s32.totalorder %s55, %s57
    %p64 = scmp.eq.s32.totalorder %s26, 3
    %p65 = por %p63, %p64
    %p66 = scmp.ne.s32.totalorder %s57, %s58
    %p67 = scmp.eq.s32.totalorder %s26, 0
    %p68 = por %p66, %p67
    %p69 = scmp.ne.s32.totalorder %s57, %s58
    %p70 = scmp.eq.s32.totalorder %s27, 3
    %p71 = por %p69, %p70
    %p73 = scmp.ne.s32.totalorder %s58, %s72
    %p74 = scmp.eq.s32.totalorder %s27, 0
    %p75 = por %p73, %p74
    %s77 = sadd.s32 %s76, 1
    %p80 = scmp.eq.s32.totalorder %s21, 3
    %p81 = scmp.ne.s32.totalorder %s76, %s78
    %p82 = scmp.eq.s32.totalorder %s21, 0
    %p83 = por %p81, %p82
    %p84 = scmp.ne.s32.totalorder %s76, %s78
    %p85 = scmp.eq.s32.totalorder %s26, 3
    %p86 = por %p84, %p85
    %p87 = scmp.ne.s32.totalorder %s78, %s79
    %p88 = scmp.eq.s32.totalorder %s26, 0
    %p89 = por %p87, %p88
    %p90 = scmp.ne.s32.totalorder %s78, %s79
    %p91 = scmp.eq.s32.totalorder %s27, 3
    %p92 = por %p90, %p91
    %p94 = scmp.ne.s32.totalorder %s79, %s93
    %p95 = scmp.eq.s32.totalorder %s27, 0
    %p96 = por %p94, %p95
    %s98 = sadd.s32 %s97, 1
    %p101 = scmp.eq.s32.totalorder %s21, 3
    %p102 = scmp.ne.s32.totalorder %s97, %s99
    %p103 = scmp.eq.s32.totalorder %s21, 0
    %p104 = por %p102, %p103
    %p105 = scmp.ne.s32.totalorder %s97, %s99
    %p106 = scmp.eq.s32.totalorder %s26, 3
    %p107 = por %p105, %p106
    %p108 = scmp.ne.s32.totalorder %s99, %s100
    %p109 = scmp.eq.s32.totalorder %s26, 0
    %p110 = por %p108, %p109
    %p111 = scmp.ne.s32.totalorder %s99, %s100
    %p112 = scmp.eq.s32.totalorder %s27, 3
    %p113 = por %p111, %p112
    %p115 = scmp.ne.s32.totalorder %s100, %s114
    %p116 = scmp.eq.s32.totalorder %s27, 0
    %p117 = por %p115, %p116
    %s119 = sadd.s32 %s118, 1
    %p122 = scmp.eq.s32.totalorder %s21, 3
    %p123 = scmp.ne.s32.totalorder %s118, %s120
    %p124 = scmp.eq.s32.totalorder %s21, 0
    %p125 = por %p123, %p124
    %p126 = scmp.ne.s32.totalorder %s118, %s120
    %p127 = scmp.eq.s32.totalorder %s26, 3
    %p128 = por %p126, %p127
    %p129 = scmp.ne.s32.totalorder %s120, %s121
    %p130 = scmp.eq.s32.totalorder %s26, 0
    %p131 = por %p129, %p130
    %p132 = scmp.ne.s32.totalorder %s120, %s121
    %p133 = scmp.eq.s32.totalorder %s27, 3
    %p134 = por %p132, %p133
    %p136 = scmp.ne.s32.totalorder %s121, %s135
    %p137 = scmp.eq.s32.totalorder %s27, 0
    %p138 = por %p136, %p137
    %s140 = sadd.s32 %s139, 1
    %p143 = scmp.eq.s32.totalorder %s21, 3
    %p144 = scmp.ne.s32.totalorder %s139, %s141
    %p145 = scmp.eq.s32.totalorder %s21, 0
    %p146 = por %p144, %p145
    %p147 = scmp.ne.s32.totalorder %s139, %s141
    %p148 = scmp.eq.s32.totalorder %s26, 3
    %p149 = por %p147, %p148
    %p150 = scmp.ne.s32.totalorder %s141, %s142
    %p151 = scmp.eq.s32.totalorder %s26, 0
    %p152 = por %p150, %p151
    %p153 = scmp.ne.s32.totalorder %s141, %s142
    %p154 = scmp.eq.s32.totalorder %s27, 3
    %p155 = por %p153, %p154
    %p157 = scmp.ne.s32.totalorder %s142, %s156
    %p158 = scmp.eq.s32.totalorder %s27, 0
    %p159 = por %p157, %p158
    %s161 = sadd.s32 %s160, 1
    %p164 = scmp.eq.s32.totalorder %s21, 3
    %p165 = scmp.ne.s32.totalorder %s160, %s162
    %p166 = scmp.eq.s32.totalorder %s21, 0
    %p167 = por %p165, %p166
    %p168 = scmp.ne.s32.totalorder %s160, %s162
    %p169 = scmp.eq.s32.totalorder %s26, 3
    %p170 = por %p168, %p169
    %p171 = scmp.ne.s32.totalorder %s162, %s163
    %p172 = scmp.eq.s32.totalorder %s26, 0
    %p173 = por %p171, %p172
    %p174 = scmp.ne.s32.totalorder %s162, %s163
    %p175 = scmp.eq.s32.totalorder %s27, 3
    %p176 = por %p174, %p175
    %p178 = scmp.ne.s32.totalorder %s163, %s177
    %p179 = scmp.eq.s32.totalorder %s27, 0
    %p180 = por %p178, %p179
    %s182 = sadd.s32 %s181, 1
    %p185 = scmp.eq.s32.totalorder %s21, 3
    %p186 = scmp.ne.s32.totalorder %s181, %s183
    %p187 = scmp.eq.s32.totalorder %s21, 0
    %p188 = por %p186, %p187
    %p189 = scmp.ne.s32.totalorder %s181, %s183
    %p190 = scmp.eq.s32.totalorder %s26, 3
    %p191 = por %p189, %p190
    %p192 = scmp.ne.s32.totalorder %s183, %s184
    %p193 = scmp.eq.s32.totalorder %s26, 0
    %p194 = por %p192, %p193
    %p195 = scmp.ne.s32.totalorder %s183, %s184
    %p196 = scmp.eq.s32.totalorder %s27, 3
    %p197 = por %p195, %p196
    %p199 = scmp.ne.s32.totalorder %s184, %s198
    %p200 = scmp.eq.s32.totalorder %s27, 0
    %p201 = por %p199, %p200
    %s203 = sadd.s32 %s202, 1
    %p206 = scmp.eq.s32.totalorder %s21, 3
    %p207 = scmp.ne.s32.totalorder %s202, %s204
    %p208 = scmp.eq.s32.totalorder %s21, 0
    %p209 = por %p207, %p208
    %p210 = scmp.ne.s32.totalorder %s202, %s204
    %p211 = scmp.eq.s32.totalorder %s26, 3
    %p212 = por %p210, %p211
    %p213 = scmp.ne.s32.totalorder %s204, %s205
    %p214 = scmp.eq.s32.totalorder %s26, 0
    %p215 = por %p213, %p214
    %p216 = scmp.ne.s32.totalorder %s204, %s205
    %p217 = scmp.eq.s32.totalorder %s27, 3
    %p218 = por %p216, %p217
    %p220 = scmp.ne.s32.totalorder %s205, %s219
    %p221 = scmp.eq.s32.totalorder %s27, 0
    %p222 = por %p220, %p221
    %s224 = sadd.s32 %s223, 1
    %p227 = scmp.eq.s32.totalorder %s21, 3
    %p228 = scmp.ne.s32.totalorder %s223, %s225
    %p229 = scmp.eq.s32.totalorder %s21, 0
    %p230 = por %p228, %p229
    %p231 = scmp.ne.s32.totalorder %s223, %s225
    %p232 = scmp.eq.s32.totalorder %s26, 3
    %p233 = por %p231, %p232
    %p234 = scmp.ne.s32.totalorder %s225, %s226
    %p235 = scmp.eq.s32.totalorder %s26, 0
    %p236 = por %p234, %p235
    %p237 = scmp.ne.s32.totalorder %s225, %s226
    %p238 = scmp.eq.s32.totalorder %s27, 3
    %p239 = por %p237, %p238
    %p241 = scmp.ne.s32.totalorder %s226, %s240
    %p242 = scmp.eq.s32.totalorder %s27, 0
    %p243 = por %p241, %p242
    %s245 = sadd.s32 %s244, 1
    %p248 = scmp.eq.s32.totalorder %s21, 3
    %p249 = scmp.ne.s32.totalorder %s244, %s246
    %p250 = scmp.eq.s32.totalorder %s21, 0
    %p251 = por %p249, %p250
    %p252 = scmp.ne.s32.totalorder %s244, %s246
    %p253 = scmp.eq.s32.totalorder %s26, 3
    %p254 = por %p252, %p253
    %p255 = scmp.ne.s32.totalorder %s246, %s247
    %p256 = scmp.eq.s32.totalorder %s26, 0
    %p257 = por %p255, %p256
    %p258 = scmp.ne.s32.totalorder %s246, %s247
    %p259 = scmp.eq.s32.totalorder %s27, 3
    %p260 = por %p258, %p259
    %p262 = scmp.ne.s32.totalorder %s247, %s261
    %p263 = scmp.eq.s32.totalorder %s27, 0
    %p264 = por %p262, %p263
    %s266 = sadd.s32 %s265, 1
    %p269 = scmp.eq.s32.totalorder %s21, 3
    %p270 = scmp.ne.s32.totalorder %s265, %s267
    %p271 = scmp.eq.s32.totalorder %s21, 0
    %p272 = por %p270, %p271
    %p273 = scmp.ne.s32.totalorder %s265, %s267
    %p274 = scmp.eq.s32.totalorder %s26, 3
    %p275 = por %p273, %p274
    %p276 = scmp.ne.s32.totalorder %s267, %s268
    %p277 = scmp.eq.s32.totalorder %s26, 0
    %p278 = por %p276, %p277
    %p279 = scmp.ne.s32.totalorder %s267, %s268
    %p280 = scmp.eq.s32.totalorder %s27, 3
    %p281 = por %p279, %p280
    %p283 = scmp.ne.s32.totalorder %s268, %s282
    %p284 = scmp.eq.s32.totalorder %s27, 0
    %p285 = por %p283, %p284
    %s286 = ssub.s32 %s21, %s28
    %p287 = scmp.eq.s32.totalorder %s286, 0
    %s289 = sadd.s32 %s288, 1
    %s290 = scalar_select %p287, %s288, %s289
    %p293 = pneg %p287
    %p294 = scmp.eq.s32.totalorder %s21, 3
    %p295 = por %p293, %p294
    %p296 = scmp.ne.s32.totalorder %s288, %s291
    %p297 = scmp.eq.s32.totalorder %s21, 0
    %p298 = por %p296, %p297
    %p299 = scmp.ne.s32.totalorder %s288, %s291
    %p300 = scmp.eq.s32.totalorder %s26, 3
    %p301 = por %p299, %p300
    %p302 = scmp.ne.s32.totalorder %s291, %s292
    %p303 = scmp.eq.s32.totalorder %s26, 0
    %p304 = por %p302, %p303
    %p305 = scmp.ne.s32.totalorder %s291, %s292
    %p306 = scmp.eq.s32.totalorder %s27, 3
    %p307 = por %p305, %p306
    %p309 = scmp.ne.s32.totalorder %s292, %s308
    %p310 = scmp.eq.s32.totalorder %s27, 0
    %p311 = por %p309, %p310
    %s313 = sadd.s32 %s312, 1
    %p316 = scmp.eq.s32.totalorder %s21, 3
    %p317 = scmp.ne.s32.totalorder %s312, %s314
    %p318 = scmp.eq.s32.totalorder %s21, 0
    %p319 = por %p317, %p318
    %p320 = scmp.ne.s32.totalorder %s312, %s314
    %p321 = scmp.eq.s32.totalorder %s26, 3
    %p322 = por %p320, %p321
    %p323 = scmp.ne.s32.totalorder %s314, %s315
    %p324 = scmp.eq.s32.totalorder %s26, 0
    %p325 = por %p323, %p324
    %p326 = scmp.ne.s32.totalorder %s314, %s315
    %p327 = scmp.eq.s32.totalorder %s27, 3
    %p328 = por %p326, %p327
    %p330 = scmp.ne.s32.totalorder %s315, %s329
    %p331 = scmp.eq.s32.totalorder %s27, 0
    %p332 = por %p330, %p331
    %s334 = sadd.s32 %s333, 1
    %p337 = scmp.eq.s32.totalorder %s21, 3
    %p338 = scmp.ne.s32.totalorder %s333, %s335
    %p339 = scmp.eq.s32.totalorder %s21, 0
    %p340 = por %p338, %p339
    %p341 = scmp.ne.s32.totalorder %s333, %s335
    %p342 = scmp.eq.s32.totalorder %s26, 3
    %p343 = por %p341, %p342
    %p344 = scmp.ne.s32.totalorder %s335, %s336
    %p345 = scmp.eq.s32.totalorder %s26, 0
    %p346 = por %p344, %p345
    %p347 = scmp.ne.s32.totalorder %s335, %s336
    %p348 = scmp.eq.s32.totalorder %s27, 3
    %p349 = por %p347, %p348
    %p351 = scmp.ne.s32.totalorder %s336, %s350
    %p352 = scmp.eq.s32.totalorder %s27, 0
    %p353 = por %p351, %p352
    %p354 = scmp.le.s32.totalorder 1, %s21
    %p355 = scmp.lt.s32.totalorder %s21, 5
    %p356 = pnand %p354, %p355
    %p357 = pneg %p356
    // Predicated region
    $region9: #{recurrent_q_forward.1} parent=5 // pred_check
      _
    $region10: #{recurrent_q_forward.1} parent=5 // pred_check_branch
      %359 = sbr.rel (%p356) target = $region12
    $region11: #{recurrent_q_forward.1} parent=5 // pred_region
      %s360 = ssub.s32 %s21, 1
      // Predicated region
      $region13: #{recurrent_q_forward.1} parent=11 // pred_check
        %p361 = pneg %p68
      $region14: #{recurrent_q_forward.1} parent=11 // pred_check_branch
        %363 = sbr.rel (%p361) target = $region16
      $region15: #{recurrent_q_forward.1} parent=11 // pred_region
        _
      $region16: #{recurrent_q_forward.1} parent=11 // pred_fallthru
        _
      // Predicated region
      $region17: #{recurrent_q_forward.1} parent=11 // pred_check
        %p364 = pneg %p89
      $region18: #{recurrent_q_forward.1} parent=11 // pred_check_branch
        %366 = sbr.rel (%p364) target = $region20
      $region19: #{recurrent_q_forward.1} parent=11 // pred_region
        _
      $region20: #{recurrent_q_forward.1} parent=11 // pred_fallthru
        _
      // Predicated region
      $region21: #{recurrent_q_forward.1} parent=11 // pred_check
        %p367 = pneg %p110
      $region22: #{recurrent_q_forward.1} parent=11 // pred_check_branch
        %369 = sbr.rel (%p367) target = $region24
      $region23: #{recurrent_q_forward.1} parent=11 // pred_region
        _
      $region24: #{recurrent_q_forward.1} parent=11 // pred_fallthru
        _
      // Predicated region
      $region25: #{recurrent_q_forward.1} parent=11 // pred_check
        %p370 = pneg %p131
      $region26: #{recurrent_q_forward.1} parent=11 // pred_check_branch
        %372 = sbr.rel (%p370) target = $region28
      $region27: #{recurrent_q_forward.1} parent=11 // pred_region
        _
      $region28: #{recurrent_q_forward.1} parent=11 // pred_fallthru
        _
      // Predicated region
      $region29: #{recurrent_q_forward.1} parent=11 // pred_check
        %p373 = pneg %p152
      $region30: #{recurrent_q_forward.1} parent=11 // pred_check_branch
        %375 = sbr.rel (%p373) target = $region32
      $region31: #{recurrent_q_forward.1} parent=11 // pred_region
        _
      $region32: #{recurrent_q_forward.1} parent=11 // pred_fallthru
        _
      // Predicated region
      $region33: #{recurrent_q_forward.1} parent=11 // pred_check
        %p376 = pneg %p173
      $region34: #{recurrent_q_forward.1} parent=11 // pred_check_branch
        %378 = sbr.rel (%p376) target = $region36
      $region35: #{recurrent_q_forward.1} parent=11 // pred_region
        _
      $region36: #{recurrent_q_forward.1} parent=11 // pred_fallthru
        _
      // Predicated region
      $region37: #{recurrent_q_forward.1} parent=11 // pred_check
        %p379 = pneg %p194
      $region38: #{recurrent_q_forward.1} parent=11 // pred_check_branch
        %381 = sbr.rel (%p379) target = $region40
      $region39: #{recurrent_q_forward.1} parent=11 // pred_region
        _
      $region40: #{recurrent_q_forward.1} parent=11 // pred_fallthru
        _
      // Predicated region
      $region41: #{recurrent_q_forward.1} parent=11 // pred_check
        %p382 = pneg %p215
      $region42: #{recurrent_q_forward.1} parent=11 // pred_check_branch
        %384 = sbr.rel (%p382) target = $region44
      $region43: #{recurrent_q_forward.1} parent=11 // pred_region
        _
      $region44: #{recurrent_q_forward.1} parent=11 // pred_fallthru
        _
      // Predicated region
      $region45: #{recurrent_q_forward.1} parent=11 // pred_check
        %p385 = pneg %p236
      $region46: #{recurrent_q_forward.1} parent=11 // pred_check_branch
        %387 = sbr.rel (%p385) target = $region48
      $region47: #{recurrent_q_forward.1} parent=11 // pred_region
        _
      $region48: #{recurrent_q_forward.1} parent=11 // pred_fallthru
        _
      // Predicated region
      $region49: #{recurrent_q_forward.1} parent=11 // pred_check
        %p388 = pneg %p257
      $region50: #{recurrent_q_forward.1} parent=11 // pred_check_branch
        %390 = sbr.rel (%p388) target = $region52
      $region51: #{recurrent_q_forward.1} parent=11 // pred_region
        _
      $region52: #{recurrent_q_forward.1} parent=11 // pred_fallthru
        _
      // Predicated region
      $region53: #{recurrent_q_forward.1} parent=11 // pred_check
        %p391 = pneg %p278
      $region54: #{recurrent_q_forward.1} parent=11 // pred_check_branch
        %393 = sbr.rel (%p391) target = $region56
      $region55: #{recurrent_q_forward.1} parent=11 // pred_region
        _
      $region56: #{recurrent_q_forward.1} parent=11 // pred_fallthru
        _
    $region12: #{recurrent_q_forward.1} parent=5 // pred_fallthru
      _
    %p394 = scmp.lt.s32.totalorder %s21, 4
    // Predicated region
    $region57: #{recurrent_q_forward.1} parent=5 // pred_check
      %p395 = pneg %p394
    $region58: #{recurrent_q_forward.1} parent=5 // pred_check_branch
      %397 = sbr.rel (%p395) target = $region60
    $region59: #{recurrent_q_forward.1} parent=5 // pred_region
      // Predicated region
      $region61: #{recurrent_q_forward.1} parent=59 // pred_check
        %p398 = pneg %p41
      $region62: #{recurrent_q_forward.1} parent=59 // pred_check_branch
        %400 = sbr.rel (%p398) target = $region64
      $region63: #{recurrent_q_forward.1} parent=59 // pred_region
        %s401 = smul.u32 2, %s21
        %p402 = scmp.lt.s32.totalorder %s401, 7
        %s403 = scalar_select %p402, %s401, 7
        %s404 = smul.addr %s403, 8
        %s405 = scalar_lea.vmem %s0, %s404
        %s406 = smul.u32 2, %s21
      $region64: #{recurrent_q_forward.1} parent=59 // pred_fallthru
        _
    $region60: #{recurrent_q_forward.1} parent=5 // pred_fallthru
      _
    %p407 = scmp.le.s32.totalorder 1, %s21
    %p408 = scmp.lt.s32.totalorder %s21, 5
    %p409 = pnand %p407, %p408
    %p410 = pneg %p409
    // Predicated region
    $region65: #{recurrent_q_forward.1} parent=5 // pred_check
      _
    $region66: #{recurrent_q_forward.1} parent=5 // pred_check_branch
      %412 = sbr.rel (%p409) target = $region68
    $region67: #{recurrent_q_forward.1} parent=5 // pred_region
      %s413 = ssub.s32 %s21, 1
      %s414 = smul.u32 2, %s26
      %p415 = scmp.lt.s32.totalorder %s414, 7
      %s416 = scalar_select %p415, %s414, 7
      %s417 = smul.addr %s416, 8
      %s418 = scalar_lea.vmem %s0, %s417
      %p419 = pneg %p47
      %p420 = pneg %p44
      %p421 = pneg %p68
      %p422 = pneg %p65
      %p423 = pneg %p89
      %p424 = pneg %p86
      %p425 = pneg %p110
      %p426 = pneg %p107
      %p427 = pneg %p131
      %p428 = pneg %p128
      %p429 = pneg %p152
      %p430 = pneg %p149
      %p431 = pneg %p173
      %p432 = pneg %p170
      %p433 = pneg %p194
      %p434 = pneg %p191
      %p435 = pneg %p215
      %p436 = pneg %p212
      %p437 = pneg %p236
      %p438 = pneg %p233
      %p439 = pneg %p257
      %p440 = pneg %p254
      %p441 = pneg %p278
      %p442 = pneg %p275
      %p443 = pneg %p304
      %p444 = pneg %p301
      %s445 = smul.u32 2, %s26
      %p446 = scmp.lt.s32.totalorder %s445, 7
      %s447 = scalar_select %p446, %s445, 7
      %s448 = smul.addr %s447, 8
      %s449 = scalar_lea.vmem %s12, %s448
      %p450 = pneg %p325
      %p451 = pneg %p322
      %p452 = pneg %p346
      %p453 = pneg %p343
      %s454 = smul.u32 2, %s26
      %p455 = scmp.lt.s32.totalorder %s454, 7
      %s456 = scalar_select %p455, %s454, 7
      %s457 = smul.addr %s456, 8
      %s458 = scalar_lea.vmem %s0, %s457
      %s459 = smul.u32 2, %s26
      %s460 = smul.u32 2, %s26
      %p461 = scmp.lt.s32.totalorder %s460, 7
      %s462 = scalar_select %p461, %s460, 7
      %s463 = smul.addr %s462, 8
      %s464 = scalar_lea.vmem %s12, %s463
      %s465 = smul.u32 2, %s26
      %p466 = scmp.eq.s32.totalorder %s26, 0
      // Predicated region
      $region69: #{recurrent_q_forward.1} parent=67 // pred_check
        %p467 = pneg %p466
      $region70: #{recurrent_q_forward.1} parent=67 // pred_check_branch
        %469 = sbr.rel (%p467) target = $region72
      $region71: #{recurrent_q_forward.1} parent=67 // pred_region
        %v470 = vld [vmem:[%s1] sm:$0xff]
        %471 = vst [vmem:[#allocation2] sm:$0xff] %v470
        %v472 = vld [vmem:[%s2] sm:$0xff]
        %473 = vst [vmem:[#allocation3] sm:$0xff] %v472
      $region72: #{recurrent_q_forward.1} parent=67 // pred_fallthru
        _
      %v474 = vld [vmem:[%s458] sm:$0xff]
      %v475 = vld [vmem:[%s458 + $0x8] sm:$0xff]
      %v476 = vld [vmem:[%s3] sm:$0xff]
      %v477 = vld [vmem:[%s3 + $0x8] sm:$0xff]
      %v478 = vld [vmem:[%s4] sm:$0x1]
      %v480 = vlaneseq
      %v481 = vshrl.u32 %v480, 7
      %v482 = vsub.s32 0, %v481
      %v483 = vrot.slane %v478, %v482
      %vm485 = vcmask 130048
      %v487 = vsel %vm485, %v474, 0
      %v490 = vsel %vm485, %v475, 0
      %492 = vmatprep.subr.mxu0 0.0
      %493 = vmatpush1.msra.mxu0 %v476
      %494 = vmatprep.subr.mxu0 0.0
      %495 = vmatpush1.msra.mxu0 %v477
      %496 = vmatprep.subr.mxu0 0.0
      %497 = vmatpush1.msra.mxu0 0.0
      %498 = vmatprep.subr.mxu0 0.0
      %499 = vmatpush1.msra.mxu0 0.0
      %500 = vmatprep.subr.mxu0 0.0
      %501 = vmatpush1.msra.mxu0 0.0
      %502 = vmatprep.subr.mxu0 0.0
      %503 = vmatpush1.msra.mxu0 0.0
      %504 = vmatprep.subr.mxu0 0.0
      %505 = vmatpush1.msra.mxu0 0.0
      %506 = vmatprep.subr.mxu0 0.0
      %507 = vmatpush1.msra.mxu0 0.0
      %508 = vmatprep.subr.mxu0 0.0
      %509 = vmatpush1.msra.mxu0 0.0
      %510 = vmatprep.subr.mxu0 0.0
      %511 = vmatpush1.msra.mxu0 0.0
      %512 = vmatprep.subr.mxu0 0.0
      %513 = vmatpush1.msra.mxu0 0.0
      %514 = vmatprep.subr.mxu0 0.0
      %515 = vmatpush1.msra.mxu0 0.0
      %516 = vmatprep.subr.mxu0 0.0
      %517 = vmatpush1.msra.mxu0 0.0
      %518 = vmatprep.subr.mxu0 0.0
      %519 = vmatpush1.msra.mxu0 0.0
      %520 = vmatprep.subr.mxu0 0.0
      %521 = vmatpush1.msra.mxu0 0.0
      %522 = vmatprep.subr.mxu0 0.0
      %523 = vmatpush1.msra.mxu0 0.0
      %524 = vmatprep.subr.mxu0 0.0
      %525 = vmatpush1.msra.mxu0 0.0
      %526 = vmatprep.subr.mxu0 0.0
      %527 = vmatpush1.msra.mxu0 0.0
      %528 = vmatprep.subr.mxu0 0.0
      %529 = vmatpush1.msra.mxu0 0.0
      %530 = vmatprep.subr.mxu0 0.0
      %531 = vmatpush1.msra.mxu0 0.0
      %532 = vmatprep.subr.mxu0 0.0
      %533 = vmatpush1.msra.mxu0 0.0
      %534 = vmatprep.subr.mxu0 0.0
      %535 = vmatpush1.msra.mxu0 0.0
      %536 = vmatprep.subr.mxu0 0.0
      %537 = vmatpush1.msra.mxu0 0.0
      %538 = vmatprep.subr.mxu0 0.0
      %539 = vmatpush1.msra.mxu0 0.0
      %540 = vmatprep.subr.mxu0 0.0
      %541 = vmatpush1.msra.mxu0 0.0
      %542 = vmatprep.subr.mxu0 0.0
      %543 = vmatpush1.msra.mxu0 0.0
      %544 = vmatprep.subr.mxu0 0.0
      %545 = vmatpush1.msra.mxu0 0.0
      %546 = vmatprep.subr.mxu0 0.0
      %547 = vmatpush1.msra.mxu0 0.0
      %548 = vmatprep.subr.mxu0 0.0
      %549 = vmatpush1.msra.mxu0 0.0
      %550 = vmatprep.subr.mxu0 0.0
      %551 = vmatpush1.msra.mxu0 0.0
      %552 = vmatprep.subr.mxu0 0.0
      %553 = vmatpush1.msra.mxu0 0.0
      %554 = vmatprep.subr.mxu0 0.0
      %555 = vmatpush1.msra.mxu0 0.0
      %556 = vmatprep.mubr.f32.mxu0 0.0
      %557 = vmatmul.mubr.f32.gmra.mrb[0].mxu0 %v487
      %v558 = vpop.f32.mrb[0].mxu0
      %v559 = vadd.f32 %v483, %v558
      %v560 = vpop.f32.mrb[0].mxu0
      %561 = vmatprep.mubr.f32.mxu0 0.0
      %562 = vmatmul.mubr.f32.gmra.mrb[0].mxu0 %v490
      %v563 = vpop.f32.mrb[0].mxu0
      %v564 = vadd.f32 %v483, %v563
      %v565 = vpop.f32.mrb[0].mxu0
      %566 = vdwg.mxu0
      %vm567 = vcmp.gt.f32.partialorder %v559, 0.0
      %vm568 = vcmp.gt.f32.partialorder %v564, 0.0
      %v569 = vmul.f32 %v559, 0.01
      %v570 = vmul.f32 %v564, 0.01
      %v571 = vsel %vm567, %v559, %v569
      %v572 = vsel %vm568, %v564, %v570
      %v573 = vld [vmem:[%s5] sm:$0xff]
      %v574 = vld [vmem:[%s5 + $0x8] sm:$0xff]
      %v575 = vld [vmem:[%s5 + $0x10] sm:$0xff]
      %v576 = vld [vmem:[%s5 + $0x18] sm:$0xff]
      %v577 = vld [vmem:[%s5 + $0x20] sm:$0xff]
      %v578 = vld [vmem:[%s5 + $0x28] sm:$0xff]
      %v579 = vld [vmem:[%s5 + $0x30] sm:$0xff]
      %v580 = vld [vmem:[%s5 + $0x38] sm:$0xff]
      %v581 = vld [vmem:[%s5 + $0x40] sm:$0xff]
      %v582 = vld [vmem:[%s5 + $0x48] sm:$0xff]
      %v583 = vld [vmem:[%s5 + $0x50] sm:$0xff]
      %v584 = vld [vmem:[%s5 + $0x58] sm:$0xff]
      %v585 = vld [vmem:[%s5 + $0x60] sm:$0xff]
      %v586 = vld [vmem:[%s5 + $0x68] sm:$0xff]
      %v587 = vld [vmem:[%s5 + $0x70] sm:$0xff]
      %v588 = vld [vmem:[%s5 + $0x78] sm:$0xff]
      %v589 = vld [vmem:[%s6] sm:$0x1]
      %v591 = vlaneseq
      %v592 = vshrl.u32 %v591, 7
      %v593 = vsub.s32 0, %v592
      %v594 = vrot.slane %v589, %v593
      %596 = vmatprep.subr.mxu0 0.0
      %597 = vmatpush1.msra.mxu0 %v573
      %598 = vmatprep.subr.mxu0 0.0
      %599 = vmatpush1.msra.mxu0 %v574
      %600 = vmatprep.subr.mxu0 0.0
      %601 = vmatpush1.msra.mxu0 %v575
      %602 = vmatprep.subr.mxu0 0.0
      %603 = vmatpush1.msra.mxu0 %v576
      %604 = vmatprep.subr.mxu0 0.0
      %605 = vmatpush1.msra.mxu0 %v577
      %606 = vmatprep.subr.mxu0 0.0
      %607 = vmatpush1.msra.mxu0 %v578
      %608 = vmatprep.subr.mxu0 0.0
      %609 = vmatpush1.msra.mxu0 %v579
      %610 = vmatprep.subr.mxu0 0.0
      %611 = vmatpush1.msra.mxu0 %v580
      %612 = vmatprep.subr.mxu0 0.0
      %613 = vmatpush1.msra.mxu0 %v581
      %614 = vmatprep.subr.mxu0 0.0
      %615 = vmatpush1.msra.mxu0 %v582
      %616 = vmatprep.subr.mxu0 0.0
      %617 = vmatpush1.msra.mxu0 %v583
      %618 = vmatprep.subr.mxu0 0.0
      %619 = vmatpush1.msra.mxu0 %v584
      %620 = vmatprep.subr.mxu0 0.0
      %621 = vmatpush1.msra.mxu0 %v585
      %622 = vmatprep.subr.mxu0 0.0
      %623 = vmatpush1.msra.mxu0 %v586
      %624 = vmatprep.subr.mxu0 0.0
      %625 = vmatpush1.msra.mxu0 %v587
      %626 = vmatprep.subr.mxu0 0.0
      %627 = vmatpush1.msra.mxu0 %v588
      %628 = vmatprep.subr.mxu0 0.0
      %629 = vmatpush1.msra.mxu0 0.0
      %630 = vmatprep.subr.mxu0 0.0
      %631 = vmatpush1.msra.mxu0 0.0
      %632 = vmatprep.subr.mxu0 0.0
      %633 = vmatpush1.msra.mxu0 0.0
      %634 = vmatprep.subr.mxu0 0.0
      %635 = vmatpush1.msra.mxu0 0.0
      %636 = vmatprep.subr.mxu0 0.0
      %637 = vmatpush1.msra.mxu0 0.0
      %638 = vmatprep.subr.mxu0 0.0
      %639 = vmatpush1.msra.mxu0 0.0
      %640 = vmatprep.subr.mxu0 0.0
      %641 = vmatpush1.msra.mxu0 0.0
      %642 = vmatprep.subr.mxu0 0.0
      %643 = vmatpush1.msra.mxu0 0.0
      %644 = vmatprep.subr.mxu0 0.0
      %645 = vmatpush1.msra.mxu0 0.0
      %646 = vmatprep.subr.mxu0 0.0
      %647 = vmatpush1.msra.mxu0 0.0
      %648 = vmatprep.subr.mxu0 0.0
      %649 = vmatpush1.msra.mxu0 0.0
      %650 = vmatprep.subr.mxu0 0.0
      %651 = vmatpush1.msra.mxu0 0.0
      %652 = vmatprep.subr.mxu0 0.0
      %653 = vmatpush1.msra.mxu0 0.0
      %654 = vmatprep.subr.mxu0 0.0
      %655 = vmatpush1.msra.mxu0 0.0
      %656 = vmatprep.subr.mxu0 0.0
      %657 = vmatpush1.msra.mxu0 0.0
      %658 = vmatprep.subr.mxu0 0.0
      %659 = vmatpush1.msra.mxu0 0.0
      %660 = vmatprep.mubr.f32.mxu0 0.0
      %661 = vmatmul.mubr.f32.gmra.mrb[0].mxu0 %v571
      %v662 = vpop.f32.mrb[0].mxu0
      %v663 = vadd.f32 %v594, %v662
      %v664 = vpop.f32.mrb[0].mxu0
      %665 = vmatprep.mubr.f32.mxu0 0.0
      %666 = vmatmul.mubr.f32.gmra.mrb[0].mxu0 %v572
      %v667 = vpop.f32.mrb[0].mxu0
      %v668 = vadd.f32 %v594, %v667
      %v669 = vpop.f32.mrb[0].mxu0
      %670 = vdwg.mxu0
      %vm671 = vcmp.gt.f32.partialorder %v663, 0.0
      %vm672 = vcmp.gt.f32.partialorder %v668, 0.0
      %v673 = vmul.f32 %v663, 0.01
      %v674 = vmul.f32 %v668, 0.01
      %v675 = vsel %vm671, %v663, %v673
      %v676 = vsel %vm672, %v668, %v674
      %v677 = vld [vmem:[%s7] sm:$0xff]
      %v678 = vld [vmem:[%s7 + $0x8] sm:$0xff]
      %v679 = vld [vmem:[%s7 + $0x10] sm:$0xff]
      %v680 = vld [vmem:[%s7 + $0x18] sm:$0xff]
      %v681 = vld [vmem:[%s7 + $0x20] sm:$0xff]
      %v682 = vld [vmem:[%s7 + $0x28] sm:$0xff]
      %v683 = vld [vmem:[%s7 + $0x30] sm:$0xff]
      %v684 = vld [vmem:[%s7 + $0x38] sm:$0xff]
      %v685 = vld [vmem:[%s7 + $0x40] sm:$0xff]
      %v686 = vld [vmem:[%s7 + $0x48] sm:$0xff]
      %v687 = vld [vmem:[%s7 + $0x50] sm:$0xff]
      %v688 = vld [vmem:[%s7 + $0x58] sm:$0xff]
      %v689 = vld [vmem:[%s7 + $0x60] sm:$0xff]
      %v690 = vld [vmem:[%s7 + $0x68] sm:$0xff]
      %v691 = vld [vmem:[%s7 + $0x70] sm:$0xff]
      %v692 = vld [vmem:[%s7 + $0x78] sm:$0xff]
      %v693 = vld [vmem:[%s7 + $0x80] sm:$0xff]
      %v694 = vld [vmem:[%s7 + $0x88] sm:$0xff]
      %v695 = vld [vmem:[%s7 + $0x90] sm:$0xff]
      %v696 = vld [vmem:[%s7 + $0x98] sm:$0xff]
      %v697 = vld [vmem:[%s7 + $0xa0] sm:$0xff]
      %v698 = vld [vmem:[%s7 + $0xa8] sm:$0xff]
      %v699 = vld [vmem:[%s7 + $0xb0] sm:$0xff]
      %v700 = vld [vmem:[%s7 + $0xb8] sm:$0xff]
      %v701 = vld [vmem:[%s7 + $0xc0] sm:$0xff]
      %v702 = vld [vmem:[%s7 + $0xc8] sm:$0xff]
      %v703 = vld [vmem:[%s7 + $0xd0] sm:$0xff]
      %v704 = vld [vmem:[%s7 + $0xd8] sm:$0xff]
      %v705 = vld [vmem:[%s7 + $0xe0] sm:$0xff]
      %v706 = vld [vmem:[%s7 + $0xe8] sm:$0xff]
      %v707 = vld [vmem:[%s7 + $0xf0] sm:$0xff]
      %v708 = vld [vmem:[%s7 + $0xf8] sm:$0xff]
      %v709 = vld [vmem:[%s7 + $0x100] sm:$0xff]
      %v710 = vld [vmem:[%s7 + $0x108] sm:$0xff]
      %v711 = vld [vmem:[%s7 + $0x110] sm:$0xff]
      %v712 = vld [vmem:[%s7 + $0x118] sm:$0xff]
      %v713 = vld [vmem:[%s7 + $0x120] sm:$0xff]
      %v714 = vld [vmem:[%s7 + $0x128] sm:$0xff]
      %v715 = vld [vmem:[%s7 + $0x130] sm:$0xff]
      %v716 = vld [vmem:[%s7 + $0x138] sm:$0xff]
      %v717 = vld [vmem:[%s7 + $0x140] sm:$0xff]
      %v718 = vld [vmem:[%s7 + $0x148] sm:$0xff]
      %v719 = vld [vmem:[%s7 + $0x150] sm:$0xff]
      %v720 = vld [vmem:[%s7 + $0x158] sm:$0xff]
      %v721 = vld [vmem:[%s7 + $0x160] sm:$0xff]
      %v722 = vld [vmem:[%s7 + $0x168] sm:$0xff]
      %v723 = vld [vmem:[%s7 + $0x170] sm:$0xff]
      %v724 = vld [vmem:[%s7 + $0x178] sm:$0xff]
      %v725 = vld [vmem:[%s7 + $0x180] sm:$0xff]
      %v726 = vld [vmem:[%s7 + $0x188] sm:$0xff]
      %v727 = vld [vmem:[%s7 + $0x190] sm:$0xff]
      %v728 = vld [vmem:[%s7 + $0x198] sm:$0xff]
      %v729 = vld [vmem:[%s7 + $0x1a0] sm:$0xff]
      %v730 = vld [vmem:[%s7 + $0x1a8] sm:$0xff]
      %v731 = vld [vmem:[%s7 + $0x1b0] sm:$0xff]
      %v732 = vld [vmem:[%s7 + $0x1b8] sm:$0xff]
      %v733 = vld [vmem:[%s7 + $0x1c0] sm:$0xff]
      %v734 = vld [vmem:[%s7 + $0x1c8] sm:$0xff]
      %v735 = vld [vmem:[%s7 + $0x1d0] sm:$0xff]
      %v736 = vld [vmem:[%s7 + $0x1d8] sm:$0xff]
      %v737 = vld [vmem:[%s7 + $0x1e0] sm:$0xff]
      %v738 = vld [vmem:[%s7 + $0x1e8] sm:$0xff]
      %v739 = vld [vmem:[%s7 + $0x1f0] sm:$0xff]
      %v740 = vld [vmem:[%s7 + $0x1f8] sm:$0xff]
      %v741 = vld [vmem:[%s9] sm:$0xf]
      %v743 = vlaneseq
      %v744 = vshrl.u32 %v743, 7
      %v745 = vsub.s32 0, %v744
      %v746 = vrot.slane %v741, %v745
      %v747 = vlaneseq
      %v748 = vshrl.u32 %v747, 7
      %v749 = vsub.s32 1, %v748
      %v750 = vrot.slane %v741, %v749
      %v751 = vlaneseq
      %v752 = vshrl.u32 %v751, 7
      %v753 = vsub.s32 2, %v752
      %v754 = vrot.slane %v741, %v753
      %v755 = vlaneseq
      %v756 = vshrl.u32 %v755, 7
      %v757 = vsub.s32 3, %v756
      %v758 = vrot.slane %v741, %v757
      %763 = vmatprep.subr.mxu0 %v678
      %764 = vmatpush1.msra.mxu0 %v677
      %765 = vmatprep.subr.mxu0 %v682
      %766 = vmatpush1.msra.mxu0 %v681
      %767 = vmatprep.subr.mxu0 %v686
      %768 = vmatpush1.msra.mxu0 %v685
      %769 = vmatprep.subr.mxu0 %v690
      %770 = vmatpush1.msra.mxu0 %v689
      %771 = vmatprep.subr.mxu0 %v694
      %772 = vmatpush1.msra.mxu0 %v693
      %773 = vmatprep.subr.mxu0 %v698
      %774 = vmatpush1.msra.mxu0 %v697
      %775 = vmatprep.subr.mxu0 %v702
      %776 = vmatpush1.msra.mxu0 %v701
      %777 = vmatprep.subr.mxu0 %v706
      %778 = vmatpush1.msra.mxu0 %v705
      %779 = vmatprep.subr.mxu0 %v710
      %780 = vmatpush1.msra.mxu0 %v709
      %781 = vmatprep.subr.mxu0 %v714
      %782 = vmatpush1.msra.mxu0 %v713
      %783 = vmatprep.subr.mxu0 %v718
      %784 = vmatpush1.msra.mxu0 %v717
      %785 = vmatprep.subr.mxu0 %v722
      %786 = vmatpush1.msra.mxu0 %v721
      %787 = vmatprep.subr.mxu0 %v726
      %788 = vmatpush1.msra.mxu0 %v725
      %789 = vmatprep.subr.mxu0 %v730
      %790 = vmatpush1.msra.mxu0 %v729
      %791 = vmatprep.subr.mxu0 %v734
      %792 = vmatpush1.msra.mxu0 %v733
      %793 = vmatprep.subr.mxu0 %v738
      %794 = vmatpush1.msra.mxu0 %v737
      %795 = vmatprep.subr.mxu0 0.0
      %796 = vmatpush1.msra.mxu0 0.0
      %797 = vmatprep.subr.mxu0 0.0
      %798 = vmatpush1.msra.mxu0 0.0
      %799 = vmatprep.subr.mxu0 0.0
      %800 = vmatpush1.msra.mxu0 0.0
      %801 = vmatprep.subr.mxu0 0.0
      %802 = vmatpush1.msra.mxu0 0.0
      %803 = vmatprep.subr.mxu0 0.0
      %804 = vmatpush1.msra.mxu0 0.0
      %805 = vmatprep.subr.mxu0 0.0
      %806 = vmatpush1.msra.mxu0 0.0
      %807 = vmatprep.subr.mxu0 0.0
      %808 = vmatpush1.msra.mxu0 0.0
      %809 = vmatprep.subr.mxu0 0.0
      %810 = vmatpush1.msra.mxu0 0.0
      %811 = vmatprep.subr.mxu0 0.0
      %812 = vmatpush1.msra.mxu0 0.0
      %813 = vmatprep.subr.mxu0 0.0
      %814 = vmatpush1.msra.mxu0 0.0
      %815 = vmatprep.subr.mxu0 0.0
      %816 = vmatpush1.msra.mxu0 0.0
      %817 = vmatprep.subr.mxu0 0.0
      %818 = vmatpush1.msra.mxu0 0.0
      %819 = vmatprep.subr.mxu0 0.0
      %820 = vmatpush1.msra.mxu0 0.0
      %821 = vmatprep.subr.mxu0 0.0
      %822 = vmatpush1.msra.mxu0 0.0
      %823 = vmatprep.subr.mxu0 0.0
      %824 = vmatpush1.msra.mxu0 0.0
      %825 = vmatprep.subr.mxu0 0.0
      %826 = vmatpush1.msra.mxu0 0.0
      %827 = vmatprep.mubr.f32.mxu0 0.0
      %828 = vmatmul.mubr.f32.gmra.mrb[0].mxu0 %v675
      %v829 = vpop.f32.mrb[0].mxu0
      %v830 = vadd.f32 %v746, %v829
      %v831 = vpop.f32.mrb[0].mxu0
      %v832 = vadd.f32 %v750, %v831
      %833 = vmatprep.mubr.f32.mxu0 0.0
      %834 = vmatmul.mubr.f32.gmra.mrb[0].mxu0 %v676
      %v835 = vpop.f32.mrb[0].mxu0
      %v836 = vadd.f32 %v746, %v835
      %v837 = vpop.f32.mrb[0].mxu0
      %v838 = vadd.f32 %v750, %v837
      %839 = vdwg.mxu0
      %840 = vmatprep.subr.mxu0 %v680
      %841 = vmatpush1.msra.mxu0 %v679
      %842 = vmatprep.subr.mxu0 %v684
      %843 = vmatpush1.msra.mxu0 %v683
      %844 = vmatprep.subr.mxu0 %v688
      %845 = vmatpush1.msra.mxu0 %v687
      %846 = vmatprep.subr.mxu0 %v692
      %847 = vmatpush1.msra.mxu0 %v691
      %848 = vmatprep.subr.mxu0 %v696
      %849 = vmatpush1.msra.mxu0 %v695
      %850 = vmatprep.subr.mxu0 %v700
      %851 = vmatpush1.msra.mxu0 %v699
      %852 = vmatprep.subr.mxu0 %v704
      %853 = vmatpush1.msra.mxu0 %v703
      %854 = vmatprep.subr.mxu0 %v708
      %855 = vmatpush1.msra.mxu0 %v707
      %856 = vmatprep.subr.mxu0 %v712
      %857 = vmatpush1.msra.mxu0 %v711
      %858 = vmatprep.subr.mxu0 %v716
      %859 = vmatpush1.msra.mxu0 %v715
      %860 = vmatprep.subr.mxu0 %v720
      %861 = vmatpush1.msra.mxu0 %v719
      %862 = vmatprep.subr.mxu0 %v724
      %863 = vmatpush1.msra.mxu0 %v723
      %864 = vmatprep.subr.mxu0 %v728
      %865 = vmatpush1.msra.mxu0 %v727
      %866 = vmatprep.subr.mxu0 %v732
      %867 = vmatpush1.msra.mxu0 %v731
      %868 = vmatprep.subr.mxu0 %v736
      %869 = vmatpush1.msra.mxu0 %v735
      %870 = vmatprep.subr.mxu0 %v740
      %871 = vmatpush1.msra.mxu0 %v739
      %872 = vmatprep.subr.mxu0 0.0
      %873 = vmatpush1.msra.mxu0 0.0
      %874 = vmatprep.subr.mxu0 0.0
      %875 = vmatpush1.msra.mxu0 0.0
      %876 = vmatprep.subr.mxu0 0.0
      %877 = vmatpush1.msra.mxu0 0.0
      %878 = vmatprep.subr.mxu0 0.0
      %879 = vmatpush1.msra.mxu0 0.0
      %880 = vmatprep.subr.mxu0 0.0
      %881 = vmatpush1.msra.mxu0 0.0
      %882 = vmatprep.subr.mxu0 0.0
      %883 = vmatpush1.msra.mxu0 0.0
      %884 = vmatprep.subr.mxu0 0.0
      %885 = vmatpush1.msra.mxu0 0.0
      %886 = vmatprep.subr.mxu0 0.0
      %887 = vmatpush1.msra.mxu0 0.0
      %888 = vmatprep.subr.mxu0 0.0
      %889 = vmatpush1.msra.mxu0 0.0
      %890 = vmatprep.subr.mxu0 0.0
      %891 = vmatpush1.msra.mxu0 0.0
      %892 = vmatprep.subr.mxu0 0.0
      %893 = vmatpush1.msra.mxu0 0.0
      %894 = vmatprep.subr.mxu0 0.0
      %895 = vmatpush1.msra.mxu0 0.0
      %896 = vmatprep.subr.mxu0 0.0
      %897 = vmatpush1.msra.mxu0 0.0
      %898 = vmatprep.subr.mxu0 0.0
      %899 = vmatpush1.msra.mxu0 0.0
      %900 = vmatprep.subr.mxu0 0.0
      %901 = vmatpush1.msra.mxu0 0.0
      %902 = vmatprep.subr.mxu0 0.0
      %903 = vmatpush1.msra.mxu0 0.0
      %904 = vmatprep.mubr.f32.mxu0 0.0
      %905 = vmatmul.mubr.f32.gmra.mrb[0].mxu0 %v675
      %v906 = vpop.f32.mrb[0].mxu0
      %v907 = vadd.f32 %v754, %v906
      %v908 = vpop.f32.mrb[0].mxu0
      %v909 = vadd.f32 %v758, %v908
      %910 = vmatprep.mubr.f32.mxu0 0.0
      %911 = vmatmul.mubr.f32.gmra.mrb[0].mxu0 %v676
      %v912 = vpop.f32.mrb[0].mxu0
      %v913 = vadd.f32 %v754, %v912
      %v914 = vpop.f32.mrb[0].mxu0
      %v915 = vadd.f32 %v758, %v914
      %916 = vdwg.mxu0
      %917 = vst [vmem:[#allocation5] sm:$0xff] %v830
      %918 = vst [vmem:[#allocation5 + $0x8] sm:$0xff] %v832
      %919 = vst [vmem:[#allocation5 + $0x10] sm:$0xff] %v907
      %920 = vst [vmem:[#allocation5 + $0x18] sm:$0xff] %v909
      %921 = vst [vmem:[#allocation5 + $0x20] sm:$0xff] %v836
      %922 = vst [vmem:[#allocation5 + $0x28] sm:$0xff] %v838
      %923 = vst [vmem:[#allocation5 + $0x30] sm:$0xff] %v913
      %924 = vst [vmem:[#allocation5 + $0x38] sm:$0xff] %v915
      %v925 = vld [vmem:[#allocation2] sm:$0xff]
      %v926 = vld [vmem:[#allocation3] sm:$0xff]
      %s927 = smul.u32 0, 4
      %s928 = smul.addr %s927, 8
      %s929 = scalar_lea.vmem [#allocation5], %s928
      %v930 = vld [vmem:[%s929] sm:$0xff]
      %v931 = vld [vmem:[%s929 + $0x8] sm:$0xff]
      %v932 = vld [vmem:[%s929 + $0x10] sm:$0xff]
      %v933 = vld [vmem:[%s929 + $0x18] sm:$0xff]
      %v934 = vld [vmem:[%s8] sm:$0xff]
      %v935 = vld [vmem:[%s8 + $0x8] sm:$0xff]
      %v936 = vld [vmem:[%s8 + $0x10] sm:$0xff]
      %v937 = vld [vmem:[%s8 + $0x18] sm:$0xff]
      %v938 = vld [vmem:[%s8 + $0x20] sm:$0xff]
      %v939 = vld [vmem:[%s8 + $0x28] sm:$0xff]
      %v940 = vld [vmem:[%s8 + $0x30] sm:$0xff]
      %v941 = vld [vmem:[%s8 + $0x38] sm:$0xff]
      %v942 = vld [vmem:[%s8 + $0x40] sm:$0xff]
      %v943 = vld [vmem:[%s8 + $0x48] sm:$0xff]
      %v944 = vld [vmem:[%s8 + $0x50] sm:$0xff]
      %v945 = vld [vmem:[%s8 + $0x58] sm:$0xff]
      %v946 = vld [vmem:[%s8 + $0x60] sm:$0xff]
      %v947 = vld [vmem:[%s8 + $0x68] sm:$0xff]
      %v948 = vld [vmem:[%s8 + $0x70] sm:$0xff]
      %v949 = vld [vmem:[%s8 + $0x78] sm:$0xff]
      %v950 = vld [vmem:[%s8 + $0x80] sm:$0xff]
      %v951 = vld [vmem:[%s8 + $0x88] sm:$0xff]
      %v952 = vld [vmem:[%s8 + $0x90] sm:$0xff]
      %v953 = vld [vmem:[%s8 + $0x98] sm:$0xff]
      %v954 = vld [vmem:[%s8 + $0xa0] sm:$0xff]
      %v955 = vld [vmem:[%s8 + $0xa8] sm:$0xff]
      %v956 = vld [vmem:[%s8 + $0xb0] sm:$0xff]
      %v957 = vld [vmem:[%s8 + $0xb8] sm:$0xff]
      %v958 = vld [vmem:[%s8 + $0xc0] sm:$0xff]
      %v959 = vld [vmem:[%s8 + $0xc8] sm:$0xff]
      %v960 = vld [vmem:[%s8 + $0xd0] sm:$0xff]
      %v961 = vld [vmem:[%s8 + $0xd8] sm:$0xff]
      %v962 = vld [vmem:[%s8 + $0xe0] sm:$0xff]
      %v963 = vld [vmem:[%s8 + $0xe8] sm:$0xff]
      %v964 = vld [vmem:[%s8 + $0xf0] sm:$0xff]
      %v965 = vld [vmem:[%s8 + $0xf8] sm:$0xff]
      %v966 = vld [vmem:[%s8 + $0x100] sm:$0xff]
      %v967 = vld [vmem:[%s8 + $0x108] sm:$0xff]
      %v968 = vld [vmem:[%s8 + $0x110] sm:$0xff]
      %v969 = vld [vmem:[%s8 + $0x118] sm:$0xff]
      %v970 = vld [vmem:[%s8 + $0x120] sm:$0xff]
      %v971 = vld [vmem:[%s8 + $0x128] sm:$0xff]
      %v972 = vld [vmem:[%s8 + $0x130] sm:$0xff]
      %v973 = vld [vmem:[%s8 + $0x138] sm:$0xff]
      %v974 = vld [vmem:[%s8 + $0x140] sm:$0xff]
      %v975 = vld [vmem:[%s8 + $0x148] sm:$0xff]
      %v976 = vld [vmem:[%s8 + $0x150] sm:$0xff]
      %v977 = vld [vmem:[%s8 + $0x158] sm:$0xff]
      %v978 = vld [vmem:[%s8 + $0x160] sm:$0xff]
      %v979 = vld [vmem:[%s8 + $0x168] sm:$0xff]
      %v980 = vld [vmem:[%s8 + $0x170] sm:$0xff]
      %v981 = vld [vmem:[%s8 + $0x178] sm:$0xff]
      %v982 = vld [vmem:[%s8 + $0x180] sm:$0xff]
      %v983 = vld [vmem:[%s8 + $0x188] sm:$0xff]
      %v984 = vld [vmem:[%s8 + $0x190] sm:$0xff]
      %v985 = vld [vmem:[%s8 + $0x198] sm:$0xff]
      %v986 = vld [vmem:[%s8 + $0x1a0] sm:$0xff]
      %v987 = vld [vmem:[%s8 + $0x1a8] sm:$0xff]
      %v988 = vld [vmem:[%s8 + $0x1b0] sm:$0xff]
      %v989 = vld [vmem:[%s8 + $0x1b8] sm:$0xff]
      %v990 = vld [vmem:[%s8 + $0x1c0] sm:$0xff]
      %v991 = vld [vmem:[%s8 + $0x1c8] sm:$0xff]
      %v992 = vld [vmem:[%s8 + $0x1d0] sm:$0xff]
      %v993 = vld [vmem:[%s8 + $0x1d8] sm:$0xff]
      %v994 = vld [vmem:[%s8 + $0x1e0] sm:$0xff]
      %v995 = vld [vmem:[%s8 + $0x1e8] sm:$0xff]
      %v996 = vld [vmem:[%s8 + $0x1f0] sm:$0xff]
      %v997 = vld [vmem:[%s8 + $0x1f8] sm:$0xff]
      %998 = vmatprep.subr.mxu0 %v935
      %999 = vmatpush1.msra.mxu0 %v934
      %1000 = vmatprep.subr.mxu0 %v939
      %1001 = vmatpush1.msra.mxu0 %v938
      %1002 = vmatprep.subr.mxu0 %v943
      %1003 = vmatpush1.msra.mxu0 %v942
      %1004 = vmatprep.subr.mxu0 %v947
      %1005 = vmatpush1.msra.mxu0 %v946
      %1006 = vmatprep.subr.mxu0 %v951
      %1007 = vmatpush1.msra.mxu0 %v950
      %1008 = vmatprep.subr.mxu0 %v955
      %1009 = vmatpush1.msra.mxu0 %v954
      %1010 = vmatprep.subr.mxu0 %v959
      %1011 = vmatpush1.msra.mxu0 %v958
      %1012 = vmatprep.subr.mxu0 %v963
      %1013 = vmatpush1.msra.mxu0 %v962
      %1014 = vmatprep.subr.mxu0 %v967
      %1015 = vmatpush1.msra.mxu0 %v966
      %1016 = vmatprep.subr.mxu0 %v971
      %1017 = vmatpush1.msra.mxu0 %v970
      %1018 = vmatprep.subr.mxu0 %v975
      %1019 = vmatpush1.msra.mxu0 %v974
      %1020 = vmatprep.subr.mxu0 %v979
      %1021 = vmatpush1.msra.mxu0 %v978
      %1022 = vmatprep.subr.mxu0 %v983
      %1023 = vmatpush1.msra.mxu0 %v982
      %1024 = vmatprep.subr.mxu0 %v987
      %1025 = vmatpush1.msra.mxu0 %v986
      %1026 = vmatprep.subr.mxu0 %v991
      %1027 = vmatpush1.msra.mxu0 %v990
      %1028 = vmatprep.subr.mxu0 %v995
      %1029 = vmatpush1.msra.mxu0 %v994
      %1030 = vmatprep.subr.mxu0 0.0
      %1031 = vmatpush1.msra.mxu0 0.0
      %1032 = vmatprep.subr.mxu0 0.0
      %1033 = vmatpush1.msra.mxu0 0.0
      %1034 = vmatprep.subr.mxu0 0.0
      %1035 = vmatpush1.msra.mxu0 0.0
      %1036 = vmatprep.subr.mxu0 0.0
      %1037 = vmatpush1.msra.mxu0 0.0
      %1038 = vmatprep.subr.mxu0 0.0
      %1039 = vmatpush1.msra.mxu0 0.0
      %1040 = vmatprep.subr.mxu0 0.0
      %1041 = vmatpush1.msra.mxu0 0.0
      %1042 = vmatprep.subr.mxu0 0.0
      %1043 = vmatpush1.msra.mxu0 0.0
      %1044 = vmatprep.subr.mxu0 0.0
      %1045 = vmatpush1.msra.mxu0 0.0
      %1046 = vmatprep.subr.mxu0 0.0
      %1047 = vmatpush1.msra.mxu0 0.0
      %1048 = vmatprep.subr.mxu0 0.0
      %1049 = vmatpush1.msra.mxu0 0.0
      %1050 = vmatprep.subr.mxu0 0.0
      %1051 = vmatpush1.msra.mxu0 0.0
      %1052 = vmatprep.subr.mxu0 0.0
      %1053 = vmatpush1.msra.mxu0 0.0
      %1054 = vmatprep.subr.mxu0 0.0
      %1055 = vmatpush1.msra.mxu0 0.0
      %1056 = vmatprep.subr.mxu0 0.0
      %1057 = vmatpush1.msra.mxu0 0.0
      %1058 = vmatprep.subr.mxu0 0.0
      %1059 = vmatpush1.msra.mxu0 0.0
      %1060 = vmatprep.subr.mxu0 0.0
      %1061 = vmatpush1.msra.mxu0 0.0
      %1062 = vmatprep.mubr.f32.mxu0 0.0
      %1063 = vmatmul.mubr.f32.gmra.mrb[0].mxu0 %v925
      %v1064 = vpop.f32.mrb[0].mxu0
      %v1065 = vadd.f32 0.0, %v1064
      %v1066 = vpop.f32.mrb[0].mxu0
      %v1067 = vadd.f32 0.0, %v1066
      %1068 = vdwg.mxu0
      %1069 = vmatprep.subr.mxu0 %v937
      %1070 = vmatpush1.msra.mxu0 %v936
      %1071 = vmatprep.subr.mxu0 %v941
      %1072 = vmatpush1.msra.mxu0 %v940
      %1073 = vmatprep.subr.mxu0 %v945
      %1074 = vmatpush1.msra.mxu0 %v944
      %1075 = vmatprep.subr.mxu0 %v949
      %1076 = vmatpush1.msra.mxu0 %v948
      %1077 = vmatprep.subr.mxu0 %v953
      %1078 = vmatpush1.msra.mxu0 %v952
      %1079 = vmatprep.subr.mxu0 %v957
      %1080 = vmatpush1.msra.mxu0 %v956
      %1081 = vmatprep.subr.mxu0 %v961
      %1082 = vmatpush1.msra.mxu0 %v960
      %1083 = vmatprep.subr.mxu0 %v965
      %1084 = vmatpush1.msra.mxu0 %v964
      %1085 = vmatprep.subr.mxu0 %v969
      %1086 = vmatpush1.msra.mxu0 %v968
      %1087 = vmatprep.subr.mxu0 %v973
      %1088 = vmatpush1.msra.mxu0 %v972
      %1089 = vmatprep.subr.mxu0 %v977
      %1090 = vmatpush1.msra.mxu0 %v976
      %1091 = vmatprep.subr.mxu0 %v981
      %1092 = vmatpush1.msra.mxu0 %v980
      %1093 = vmatprep.subr.mxu0 %v985
      %1094 = vmatpush1.msra.mxu0 %v984
      %1095 = vmatprep.subr.mxu0 %v989
      %1096 = vmatpush1.msra.mxu0 %v988
      %1097 = vmatprep.subr.mxu0 %v993
      %1098 = vmatpush1.msra.mxu0 %v992
      %1099 = vmatprep.subr.mxu0 %v997
      %1100 = vmatpush1.msra.mxu0 %v996
      %1101 = vmatprep.subr.mxu0 0.0
      %1102 = vmatpush1.msra.mxu0 0.0
      %1103 = vmatprep.subr.mxu0 0.0
      %1104 = vmatpush1.msra.mxu0 0.0
      %1105 = vmatprep.subr.mxu0 0.0
      %1106 = vmatpush1.msra.mxu0 0.0
      %1107 = vmatprep.subr.mxu0 0.0
      %1108 = vmatpush1.msra.mxu0 0.0
      %1109 = vmatprep.subr.mxu0 0.0
      %1110 = vmatpush1.msra.mxu0 0.0
      %1111 = vmatprep.subr.mxu0 0.0
      %1112 = vmatpush1.msra.mxu0 0.0
      %1113 = vmatprep.subr.mxu0 0.0
      %1114 = vmatpush1.msra.mxu0 0.0
      %1115 = vmatprep.subr.mxu0 0.0
      %1116 = vmatpush1.msra.mxu0 0.0
      %1117 = vmatprep.subr.mxu0 0.0
      %1118 = vmatpush1.msra.mxu0 0.0
      %1119 = vmatprep.subr.mxu0 0.0
      %1120 = vmatpush1.msra.mxu0 0.0
      %1121 = vmatprep.subr.mxu0 0.0
      %1122 = vmatpush1.msra.mxu0 0.0
      %1123 = vmatprep.subr.mxu0 0.0
      %1124 = vmatpush1.msra.mxu0 0.0
      %1125 = vmatprep.subr.mxu0 0.0
      %1126 = vmatpush1.msra.mxu0 0.0
      %1127 = vmatprep.subr.mxu0 0.0
      %1128 = vmatpush1.msra.mxu0 0.0
      %1129 = vmatprep.subr.mxu0 0.0
      %1130 = vmatpush1.msra.mxu0 0.0
      %1131 = vmatprep.subr.mxu0 0.0
      %1132 = vmatpush1.msra.mxu0 0.0
      %1133 = vmatprep.mubr.f32.mxu0 0.0
      %1134 = vmatmul.mubr.f32.gmra.mrb[0].mxu0 %v925
      %v1135 = vpop.f32.mrb[0].mxu0
      %v1136 = vadd.f32 0.0, %v1135
      %v1137 = vpop.f32.mrb[0].mxu0
      %v1138 = vadd.f32 0.0, %v1137
      %1139 = vdwg.mxu0
      %v1140 = vadd.f32 %v930, %v1065
      %v1141 = vadd.f32 %v931, %v1067
      %v1142 = vadd.f32 %v932, %v1136
      %v1143 = vadd.f32 %v933, %v1138
      %v1144 = vxor.u32 %v1140, 2147483648
      %v1145 = vmul.f32 %v1144, 1.442695
      %v1146 = vpow.pop %v1145
      %v1147 = vadd.f32 %v1146, 1.0
      %v1148 = vrcp.pop %v1147
      %v1149 = vmul.f32 1.0, %v1148
      %v1150 = vxor.u32 %v1141, 2147483648
      %v1151 = vmul.f32 %v1150, 1.442695
      %v1152 = vpow.pop %v1151
      %v1153 = vadd.f32 %v1152, 1.0
      %v1154 = vrcp.pop %v1153
      %v1155 = vmul.f32 1.0, %v1154
      %v1156 = vtanh.pop %v1142
      %v1157 = vxor.u32 %v1143, 2147483648
      %v1158 = vmul.f32 %v1157, 1.442695
      %v1159 = vpow.pop %v1158
      %v1160 = vadd.f32 %v1159, 1.0
      %v1161 = vrcp.pop %v1160
      %v1162 = vmul.f32 1.0, %v1161
      %v1163 = vmul.f32 %v1155, %v926
      %v1164 = vmul.f32 %v1149, %v1156
      %v1165 = vadd.f32 %v1163, %v1164
      %v1166 = vtanh.pop %v1165
      %v1167 = vmul.f32 %v1162, %v1166
      %1168 = vst [vmem:[#allocation4] sm:$0xff] %v1167
      %s1169 = smul.u32 1, 4
      %s1170 = smul.addr %s1169, 8
      %s1171 = scalar_lea.vmem [#allocation5], %s1170
      %v1172 = vld [vmem:[%s1171] sm:$0xff]
      %v1173 = vld [vmem:[%s1171 + $0x8] sm:$0xff]
      %v1174 = vld [vmem:[%s1171 + $0x10] sm:$0xff]
      %v1175 = vld [vmem:[%s1171 + $0x18] sm:$0xff]
      %v1176 = vld [vmem:[%s8] sm:$0xff]
      %v1177 = vld [vmem:[%s8 + $0x8] sm:$0xff]
      %v1178 = vld [vmem:[%s8 + $0x10] sm:$0xff]
      %v1179 = vld [vmem:[%s8 + $0x18] sm:$0xff]
      %v1180 = vld [vmem:[%s8 + $0x20] sm:$0xff]
      %v1181 = vld [vmem:[%s8 + $0x28] sm:$0xff]
      %v1182 = vld [vmem:[%s8 + $0x30] sm:$0xff]
      %v1183 = vld [vmem:[%s8 + $0x38] sm:$0xff]
      %v1184 = vld [vmem:[%s8 + $0x40] sm:$0xff]
      %v1185 = vld [vmem:[%s8 + $0x48] sm:$0xff]
      %v1186 = vld [vmem:[%s8 + $0x50] sm:$0xff]
      %v1187 = vld [vmem:[%s8 + $0x58] sm:$0xff]
      %v1188 = vld [vmem:[%s8 + $0x60] sm:$0xff]
      %v1189 = vld [vmem:[%s8 + $0x68] sm:$0xff]
      %v1190 = vld [vmem:[%s8 + $0x70] sm:$0xff]
      %v1191 = vld [vmem:[%s8 + $0x78] sm:$0xff]
      %v1192 = vld [vmem:[%s8 + $0x80] sm:$0xff]
      %v1193 = vld [vmem:[%s8 + $0x88] sm:$0xff]
      %v1194 = vld [vmem:[%s8 + $0x90] sm:$0xff]
      %v1195 = vld [vmem:[%s8 + $0x98] sm:$0xff]
      %v1196 = vld [vmem:[%s8 + $0xa0] sm:$0xff]
      %v1197 = vld [vmem:[%s8 + $0xa8] sm:$0xff]
      %v1198 = vld [vmem:[%s8 + $0xb0] sm:$0xff]
      %v1199 = vld [vmem:[%s8 + $0xb8] sm:$0xff]
      %v1200 = vld [vmem:[%s8 + $0xc0] sm:$0xff]
      %v1201 = vld [vmem:[%s8 + $0xc8] sm:$0xff]
      %v1202 = vld [vmem:[%s8 + $0xd0] sm:$0xff]
      %v1203 = vld [vmem:[%s8 + $0xd8] sm:$0xff]
      %v1204 = vld [vmem:[%s8 + $0xe0] sm:$0xff]
      %v1205 = vld [vmem:[%s8 + $0xe8] sm:$0xff]
      %v1206 = vld [vmem:[%s8 + $0xf0] sm:$0xff]
      %v1207 = vld [vmem:[%s8 + $0xf8] sm:$0xff]
      %v1208 = vld [vmem:[%s8 + $0x100] sm:$0xff]
      %v1209 = vld [vmem:[%s8 + $0x108] sm:$0xff]
      %v1210 = vld [vmem:[%s8 + $0x110] sm:$0xff]
      %v1211 = vld [vmem:[%s8 + $0x118] sm:$0xff]
      %v1212 = vld [vmem:[%s8 + $0x120] sm:$0xff]
      %v1213 = vld [vmem:[%s8 + $0x128] sm:$0xff]
      %v1214 = vld [vmem:[%s8 + $0x130] sm:$0xff]
      %v1215 = vld [vmem:[%s8 + $0x138] sm:$0xff]
      %v1216 = vld [vmem:[%s8 + $0x140] sm:$0xff]
      %v1217 = vld [vmem:[%s8 + $0x148] sm:$0xff]
      %v1218 = vld [vmem:[%s8 + $0x150] sm:$0xff]
      %v1219 = vld [vmem:[%s8 + $0x158] sm:$0xff]
      %v1220 = vld [vmem:[%s8 + $0x160] sm:$0xff]
      %v1221 = vld [vmem:[%s8 + $0x168] sm:$0xff]
      %v1222 = vld [vmem:[%s8 + $0x170] sm:$0xff]
      %v1223 = vld [vmem:[%s8 + $0x178] sm:$0xff]
      %v1224 = vld [vmem:[%s8 + $0x180] sm:$0xff]
      %v1225 = vld [vmem:[%s8 + $0x188] sm:$0xff]
      %v1226 = vld [vmem:[%s8 + $0x190] sm:$0xff]
      %v1227 = vld [vmem:[%s8 + $0x198] sm:$0xff]
      %v1228 = vld [vmem:[%s8 + $0x1a0] sm:$0xff]
      %v1229 = vld [vmem:[%s8 + $0x1a8] sm:$0xff]
      %v1230 = vld [vmem:[%s8 + $0x1b0] sm:$0xff]
      %v1231 = vld [vmem:[%s8 + $0x1b8] sm:$0xff]
      %v1232 = vld [vmem:[%s8 + $0x1c0] sm:$0xff]
      %v1233 = vld [vmem:[%s8 + $0x1c8] sm:$0xff]
      %v1234 = vld [vmem:[%s8 + $0x1d0] sm:$0xff]
      %v1235 = vld [vmem:[%s8 + $0x1d8] sm:$0xff]
      %v1236 = vld [vmem:[%s8 + $0x1e0] sm:$0xff]
      %v1237 = vld [vmem:[%s8 + $0x1e8] sm:$0xff]
      %v1238 = vld [vmem:[%s8 + $0x1f0] sm:$0xff]
      %v1239 = vld [vmem:[%s8 + $0x1f8] sm:$0xff]
      %1240 = vmatprep.subr.mxu0 %v1177
      %1241 = vmatpush1.msra.mxu0 %v1176
      %1242 = vmatprep.subr.mxu0 %v1181
      %1243 = vmatpush1.msra.mxu0 %v1180
      %1244 = vmatprep.subr.mxu0 %v1185
      %1245 = vmatpush1.msra.mxu0 %v1184
      %1246 = vmatprep.subr.mxu0 %v1189
      %1247 = vmatpush1.msra.mxu0 %v1188
      %1248 = vmatprep.subr.mxu0 %v1193
      %1249 = vmatpush1.msra.mxu0 %v1192
      %1250 = vmatprep.subr.mxu0 %v1197
      %1251 = vmatpush1.msra.mxu0 %v1196
      %1252 = vmatprep.subr.mxu0 %v1201
      %1253 = vmatpush1.msra.mxu0 %v1200
      %1254 = vmatprep.subr.mxu0 %v1205
      %1255 = vmatpush1.msra.mxu0 %v1204
      %1256 = vmatprep.subr.mxu0 %v1209
      %1257 = vmatpush1.msra.mxu0 %v1208
      %1258 = vmatprep.subr.mxu0 %v1213
      %1259 = vmatpush1.msra.mxu0 %v1212
      %1260 = vmatprep.subr.mxu0 %v1217
      %1261 = vmatpush1.msra.mxu0 %v1216
      %1262 = vmatprep.subr.mxu0 %v1221
      %1263 = vmatpush1.msra.mxu0 %v1220
      %1264 = vmatprep.subr.mxu0 %v1225
      %1265 = vmatpush1.msra.mxu0 %v1224
      %1266 = vmatprep.subr.mxu0 %v1229
      %1267 = vmatpush1.msra.mxu0 %v1228
      %1268 = vmatprep.subr.mxu0 %v1233
      %1269 = vmatpush1.msra.mxu0 %v1232
      %1270 = vmatprep.subr.mxu0 %v1237
      %1271 = vmatpush1.msra.mxu0 %v1236
      %1272 = vmatprep.subr.mxu0 0.0
      %1273 = vmatpush1.msra.mxu0 0.0
      %1274 = vmatprep.subr.mxu0 0.0
      %1275 = vmatpush1.msra.mxu0 0.0
      %1276 = vmatprep.subr.mxu0 0.0
      %1277 = vmatpush1.msra.mxu0 0.0
      %1278 = vmatprep.subr.mxu0 0.0
      %1279 = vmatpush1.msra.mxu0 0.0
      %1280 = vmatprep.subr.mxu0 0.0
      %1281 = vmatpush1.msra.mxu0 0.0
      %1282 = vmatprep.subr.mxu0 0.0
      %1283 = vmatpush1.msra.mxu0 0.0
      %1284 = vmatprep.subr.mxu0 0.0
      %1285 = vmatpush1.msra.mxu0 0.0
      %1286 = vmatprep.subr.mxu0 0.0
      %1287 = vmatpush1.msra.mxu0 0.0
      %1288 = vmatprep.subr.mxu0 0.0
      %1289 = vmatpush1.msra.mxu0 0.0
      %1290 = vmatprep.subr.mxu0 0.0
      %1291 = vmatpush1.msra.mxu0 0.0
      %1292 = vmatprep.subr.mxu0 0.0
      %1293 = vmatpush1.msra.mxu0 0.0
      %1294 = vmatprep.subr.mxu0 0.0
      %1295 = vmatpush1.msra.mxu0 0.0
      %1296 = vmatprep.subr.mxu0 0.0
      %1297 = vmatpush1.msra.mxu0 0.0
      %1298 = vmatprep.subr.mxu0 0.0
      %1299 = vmatpush1.msra.mxu0 0.0
      %1300 = vmatprep.subr.mxu0 0.0
      %1301 = vmatpush1.msra.mxu0 0.0
      %1302 = vmatprep.subr.mxu0 0.0
      %1303 = vmatpush1.msra.mxu0 0.0
      %1304 = vmatprep.mubr.f32.mxu0 0.0
      %1305 = vmatmul.mubr.f32.gmra.mrb[0].mxu0 %v1167
      %v1306 = vpop.f32.mrb[0].mxu0
      %v1307 = vadd.f32 0.0, %v1306
      %v1308 = vpop.f32.mrb[0].mxu0
      %v1309 = vadd.f32 0.0, %v1308
      %1310 = vdwg.mxu0
      %1311 = vmatprep.subr.mxu0 %v1179
      %1312 = vmatpush1.msra.mxu0 %v1178
      %1313 = vmatprep.subr.mxu0 %v1183
      %1314 = vmatpush1.msra.mxu0 %v1182
      %1315 = vmatprep.subr.mxu0 %v1187
      %1316 = vmatpush1.msra.mxu0 %v1186
      %1317 = vmatprep.subr.mxu0 %v1191
      %1318 = vmatpush1.msra.mxu0 %v1190
      %1319 = vmatprep.subr.mxu0 %v1195
      %1320 = vmatpush1.msra.mxu0 %v1194
      %1321 = vmatprep.subr.mxu0 %v1199
      %1322 = vmatpush1.msra.mxu0 %v1198
      %1323 = vmatprep.subr.mxu0 %v1203
      %1324 = vmatpush1.msra.mxu0 %v1202
      %1325 = vmatprep.subr.mxu0 %v1207
      %1326 = vmatpush1.msra.mxu0 %v1206
      %1327 = vmatprep.subr.mxu0 %v1211
      %1328 = vmatpush1.msra.mxu0 %v1210
      %1329 = vmatprep.subr.mxu0 %v1215
      %1330 = vmatpush1.msra.mxu0 %v1214
      %1331 = vmatprep.subr.mxu0 %v1219
      %1332 = vmatpush1.msra.mxu0 %v1218
      %1333 = vmatprep.subr.mxu0 %v1223
      %1334 = vmatpush1.msra.mxu0 %v1222
      %1335 = vmatprep.subr.mxu0 %v1227
      %1336 = vmatpush1.msra.mxu0 %v1226
      %1337 = vmatprep.subr.mxu0 %v1231
      %1338 = vmatpush1.msra.mxu0 %v1230
      %1339 = vmatprep.subr.mxu0 %v1235
      %1340 = vmatpush1.msra.mxu0 %v1234
      %1341 = vmatprep.subr.mxu0 %v1239
      %1342 = vmatpush1.msra.mxu0 %v1238
      %1343 = vmatprep.subr.mxu0 0.0
      %1344 = vmatpush1.msra.mxu0 0.0
      %1345 = vmatprep.subr.mxu0 0.0
      %1346 = vmatpush1.msra.mxu0 0.0
      %1347 = vmatprep.subr.mxu0 0.0
      %1348 = vmatpush1.msra.mxu0 0.0
      %1349 = vmatprep.subr.mxu0 0.0
      %1350 = vmatpush1.msra.mxu0 0.0
      %1351 = vmatprep.subr.mxu0 0.0
      %1352 = vmatpush1.msra.mxu0 0.0
      %1353 = vmatprep.subr.mxu0 0.0
      %1354 = vmatpush1.msra.mxu0 0.0
      %1355 = vmatprep.subr.mxu0 0.0
      %1356 = vmatpush1.msra.mxu0 0.0
      %1357 = vmatprep.subr.mxu0 0.0
      %1358 = vmatpush1.msra.mxu0 0.0
      %1359 = vmatprep.subr.mxu0 0.0
      %1360 = vmatpush1.msra.mxu0 0.0
      %1361 = vmatprep.subr.mxu0 0.0
      %1362 = vmatpush1.msra.mxu0 0.0
      %1363 = vmatprep.subr.mxu0 0.0
      %1364 = vmatpush1.msra.mxu0 0.0
      %1365 = vmatprep.subr.mxu0 0.0
      %1366 = vmatpush1.msra.mxu0 0.0
      %1367 = vmatprep.subr.mxu0 0.0
      %1368 = vmatpush1.msra.mxu0 0.0
      %1369 = vmatprep.subr.mxu0 0.0
      %1370 = vmatpush1.msra.mxu0 0.0
      %1371 = vmatprep.subr.mxu0 0.0
      %1372 = vmatpush1.msra.mxu0 0.0
      %1373 = vmatprep.subr.mxu0 0.0
      %1374 = vmatpush1.msra.mxu0 0.0
      %1375 = vmatprep.mubr.f32.mxu0 0.0
      %1376 = vmatmul.mubr.f32.gmra.mrb[0].mxu0 %v1167
      %v1377 = vpop.f32.mrb[0].mxu0
      %v1378 = vadd.f32 0.0, %v1377
      %v1379 = vpop.f32.mrb[0].mxu0
      %v1380 = vadd.f32 0.0, %v1379
      %1381 = vdwg.mxu0
      %v1382 = vadd.f32 %v1172, %v1307
      %v1383 = vadd.f32 %v1173, %v1309
      %v1384 = vadd.f32 %v1174, %v1378
      %v1385 = vadd.f32 %v1175, %v1380
      %v1386 = vxor.u32 %v1382, 2147483648
      %v1387 = vmul.f32 %v1386, 1.442695
      %v1388 = vpow.pop %v1387
      %v1389 = vadd.f32 %v1388, 1.0
      %v1390 = vrcp.pop %v1389
      %v1391 = vmul.f32 1.0, %v1390
      %v1392 = vxor.u32 %v1383, 2147483648
      %v1393 = vmul.f32 %v1392, 1.442695
      %v1394 = vpow.pop %v1393
      %v1395 = vadd.f32 %v1394, 1.0
      %v1396 = vrcp.pop %v1395
      %v1397 = vmul.f32 1.0, %v1396
      %v1398 = vtanh.pop %v1384
      %v1399 = vxor.u32 %v1385, 2147483648
      %v1400 = vmul.f32 %v1399, 1.442695
      %v1401 = vpow.pop %v1400
      %v1402 = vadd.f32 %v1401, 1.0
      %v1403 = vrcp.pop %v1402
      %v1404 = vmul.f32 1.0, %v1403
      %v1405 = vmul.f32 %v1397, %v1165
      %v1406 = vmul.f32 %v1391, %v1398
      %v1407 = vadd.f32 %v1405, %v1406
      %v1408 = vtanh.pop %v1407
      %v1409 = vmul.f32 %v1404, %v1408
      %s1410 = scalar_lea.vmem [#allocation4], 8
      %1411 = vst [vmem:[%s1410] sm:$0xff] %v1409
      %1412 = vst [vmem:[#allocation2] sm:$0xff] %v1409
      %1413 = vst [vmem:[#allocation3] sm:$0xff] %v1407
      %v1414 = vld [vmem:[#allocation4] sm:$0xff]
      %v1415 = vld [vmem:[#allocation4 + $0x8] sm:$0xff]
      %v1416 = vld [vmem:[%s10] sm:$0xff]
      %v1417 = vld [vmem:[%s10 + $0x8] sm:$0xff]
      %v1418 = vld [vmem:[%s10 + $0x10] sm:$0xff]
      %v1419 = vld [vmem:[%s10 + $0x18] sm:$0xff]
      %v1420 = vld [vmem:[%s10 + $0x20] sm:$0xff]
      %v1421 = vld [vmem:[%s10 + $0x28] sm:$0xff]
      %v1422 = vld [vmem:[%s10 + $0x30] sm:$0xff]
      %v1423 = vld [vmem:[%s10 + $0x38] sm:$0xff]
      %v1424 = vld [vmem:[%s10 + $0x40] sm:$0xff]
      %v1425 = vld [vmem:[%s10 + $0x48] sm:$0xff]
      %v1426 = vld [vmem:[%s10 + $0x50] sm:$0xff]
      %v1427 = vld [vmem:[%s10 + $0x58] sm:$0xff]
      %v1428 = vld [vmem:[%s10 + $0x60] sm:$0xff]
      %v1429 = vld [vmem:[%s10 + $0x68] sm:$0xff]
      %v1430 = vld [vmem:[%s10 + $0x70] sm:$0xff]
      %v1431 = vld [vmem:[%s10 + $0x78] sm:$0xff]
      %v1432 = vld [vmem:[%s11] sm:$0x1]
      %v1434 = vlaneseq
      %v1435 = vshrl.u32 %v1434, 7
      %v1436 = vsub.s32 0, %v1435
      %v1437 = vrot.slane %v1432, %v1436
      %1439 = vmatprep.subr.mxu0 0.0
      %1440 = vmatpush1.msra.mxu0 %v1416
      %1441 = vmatprep.subr.mxu0 0.0
      %1442 = vmatpush1.msra.mxu0 %v1417
      %1443 = vmatprep.subr.mxu0 0.0
      %1444 = vmatpush1.msra.mxu0 %v1418
      %1445 = vmatprep.subr.mxu0 0.0
      %1446 = vmatpush1.msra.mxu0 %v1419
      %1447 = vmatprep.subr.mxu0 0.0
      %1448 = vmatpush1.msra.mxu0 %v1420
      %1449 = vmatprep.subr.mxu0 0.0
      %1450 = vmatpush1.msra.mxu0 %v1421
      %1451 = vmatprep.subr.mxu0 0.0
      %1452 = vmatpush1.msra.mxu0 %v1422
      %1453 = vmatprep.subr.mxu0 0.0
      %1454 = vmatpush1.msra.mxu0 %v1423
      %1455 = vmatprep.subr.mxu0 0.0
      %1456 = vmatpush1.msra.mxu0 %v1424
      %1457 = vmatprep.subr.mxu0 0.0
      %1458 = vmatpush1.msra.mxu0 %v1425
      %1459 = vmatprep.subr.mxu0 0.0
      %1460 = vmatpush1.msra.mxu0 %v1426
      %1461 = vmatprep.subr.mxu0 0.0
      %1462 = vmatpush1.msra.mxu0 %v1427
      %1463 = vmatprep.subr.mxu0 0.0
      %1464 = vmatpush1.msra.mxu0 %v1428
      %1465 = vmatprep.subr.mxu0 0.0
      %1466 = vmatpush1.msra.mxu0 %v1429
      %1467 = vmatprep.subr.mxu0 0.0
      %1468 = vmatpush1.msra.mxu0 %v1430
      %1469 = vmatprep.subr.mxu0 0.0
      %1470 = vmatpush1.msra.mxu0 %v1431
      %1471 = vmatprep.subr.mxu0 0.0
      %1472 = vmatpush1.msra.mxu0 0.0
      %1473 = vmatprep.subr.mxu0 0.0
      %1474 = vmatpush1.msra.mxu0 0.0
      %1475 = vmatprep.subr.mxu0 0.0
      %1476 = vmatpush1.msra.mxu0 0.0
      %1477 = vmatprep.subr.mxu0 0.0
      %1478 = vmatpush1.msra.mxu0 0.0
      %1479 = vmatprep.subr.mxu0 0.0
      %1480 = vmatpush1.msra.mxu0 0.0
      %1481 = vmatprep.subr.mxu0 0.0
      %1482 = vmatpush1.msra.mxu0 0.0
      %1483 = vmatprep.subr.mxu0 0.0
      %1484 = vmatpush1.msra.mxu0 0.0
      %1485 = vmatprep.subr.mxu0 0.0
      %1486 = vmatpush1.msra.mxu0 0.0
      %1487 = vmatprep.subr.mxu0 0.0
      %1488 = vmatpush1.msra.mxu0 0.0
      %1489 = vmatprep.subr.mxu0 0.0
      %1490 = vmatpush1.msra.mxu0 0.0
      %1491 = vmatprep.subr.mxu0 0.0
      %1492 = vmatpush1.msra.mxu0 0.0
      %1493 = vmatprep.subr.mxu0 0.0
      %1494 = vmatpush1.msra.mxu0 0.0
      %1495 = vmatprep.subr.mxu0 0.0
      %1496 = vmatpush1.msra.mxu0 0.0
      %1497 = vmatprep.subr.mxu0 0.0
      %1498 = vmatpush1.msra.mxu0 0.0
      %1499 = vmatprep.subr.mxu0 0.0
      %1500 = vmatpush1.msra.mxu0 0.0
      %1501 = vmatprep.subr.mxu0 0.0
      %1502 = vmatpush1.msra.mxu0 0.0
      %1503 = vmatprep.mubr.f32.mxu0 0.0
      %1504 = vmatmul.mubr.f32.gmra.mrb[0].mxu0 %v1414
      %v1505 = vpop.f32.mrb[0].mxu0
      %v1506 = vadd.f32 %v1437, %v1505
      %v1507 = vpop.f32.mrb[0].mxu0
      %1508 = vmatprep.mubr.f32.mxu0 0.0
      %1509 = vmatmul.mubr.f32.gmra.mrb[0].mxu0 %v1415
      %v1510 = vpop.f32.mrb[0].mxu0
      %v1511 = vadd.f32 %v1437, %v1510
      %v1512 = vpop.f32.mrb[0].mxu0
      %1513 = vdwg.mxu0
      %1514 = vst [vmem:[%s464] sm:$0xff] %v1506
      %1515 = vst [vmem:[%s464 + $0x8] sm:$0xff] %v1511
      %p1516 = scmp.eq.s32.totalorder %s26, 3
      // Predicated region
      $region73: #{recurrent_q_forward.1} parent=67 // pred_check
        %p1517 = pneg %p1516
      $region74: #{recurrent_q_forward.1} parent=67 // pred_check_branch
        %1519 = sbr.rel (%p1517) target = $region76
      $region75: #{recurrent_q_forward.1} parent=67 // pred_region
        %v1520 = vld [vmem:[#allocation2] sm:$0xff]
        %1521 = vst [vmem:[%s13] sm:$0xff] %v1520
        %v1522 = vld [vmem:[#allocation3] sm:$0xff]
        %1523 = vst [vmem:[%s14] sm:$0xff] %v1522
      $region76: #{recurrent_q_forward.1} parent=67 // pred_fallthru
        _
      %s1524 = smul.u32 2, %s26
      %p1525 = scmp.lt.s32.totalorder %s1524, 7
      %s1526 = scalar_select %p1525, %s1524, 7
      %s1527 = smul.addr %s1526, 8
      %s1528 = scalar_lea.vmem %s12, %s1527
      // Predicated region
      $region77: #{recurrent_q_forward.1} parent=67 // pred_check
        %p1529 = pneg %p301
      $region78: #{recurrent_q_forward.1} parent=67 // pred_check_branch
        %1531 = sbr.rel (%p1529) target = $region80
      $region79: #{recurrent_q_forward.1} parent=67 // pred_region
        %s1532 = smul.u32 2, %s26
      $region80: #{recurrent_q_forward.1} parent=67 // pred_fallthru
        _
      // Predicated region
      $region81: #{recurrent_q_forward.1} parent=67 // pred_check
        %p1533 = pneg %p322
      $region82: #{recurrent_q_forward.1} parent=67 // pred_check_branch
        %1535 = sbr.rel (%p1533) target = $region84
      $region83: #{recurrent_q_forward.1} parent=67 // pred_region
        _
      $region84: #{recurrent_q_forward.1} parent=67 // pred_fallthru
        _
      // Predicated region
      $region85: #{recurrent_q_forward.1} parent=67 // pred_check
        %p1536 = pneg %p343
      $region86: #{recurrent_q_forward.1} parent=67 // pred_check_branch
        %1538 = sbr.rel (%p1536) target = $region88
      $region87: #{recurrent_q_forward.1} parent=67 // pred_region
        _
      $region88: #{recurrent_q_forward.1} parent=67 // pred_fallthru
        _
      // Predicated region
      $region89: #{recurrent_q_forward.1} parent=67 // pred_check
        %p1539 = pneg %p322
      $region90: #{recurrent_q_forward.1} parent=67 // pred_check_branch
        %1541 = sbr.rel (%p1539) target = $region92
      $region91: #{recurrent_q_forward.1} parent=67 // pred_region
        _
      $region92: #{recurrent_q_forward.1} parent=67 // pred_fallthru
        _
      // Predicated region
      $region93: #{recurrent_q_forward.1} parent=67 // pred_check
        %p1542 = pneg %p343
      $region94: #{recurrent_q_forward.1} parent=67 // pred_check_branch
        %1544 = sbr.rel (%p1542) target = $region96
      $region95: #{recurrent_q_forward.1} parent=67 // pred_region
        _
      $region96: #{recurrent_q_forward.1} parent=67 // pred_fallthru
        _
    $region68: #{recurrent_q_forward.1} parent=5 // pred_fallthru
      _
    %p1545 = scmp.le.s32.totalorder 2, %s21
    // Predicated region
    $region97: #{recurrent_q_forward.1} parent=5 // pred_check
      %p1546 = pneg %p1545
    $region98: #{recurrent_q_forward.1} parent=5 // pred_check_branch
      %1548 = sbr.rel (%p1546) target = $region100
    $region99: #{recurrent_q_forward.1} parent=5 // pred_region
      %s1549 = ssub.s32 %s21, 2
      // Predicated region
      $region101: #{recurrent_q_forward.1} parent=99 // pred_check
        %p1550 = pneg %p307
      $region102: #{recurrent_q_forward.1} parent=99 // pred_check_branch
        %1552 = sbr.rel (%p1550) target = $region104
      $region103: #{recurrent_q_forward.1} parent=99 // pred_region
        %s1553 = smul.u32 2, %s27
        %p1554 = scmp.lt.s32.totalorder %s1553, 7
        %s1555 = scalar_select %p1554, %s1553, 7
        %s1556 = smul.addr %s1555, 8
        %s1557 = scalar_lea.vmem %s12, %s1556
      $region104: #{recurrent_q_forward.1} parent=99 // pred_fallthru
        _
    $region100: #{recurrent_q_forward.1} parent=5 // pred_fallthru
      _
  $region6: #{recurrent_q_forward.1} parent=0 // loop_footer
    %s25 = sadd.s32 1, %s21
  $region7: #{recurrent_q_forward.1} parent=0 // loop_footer_branch
    %20 = sbr.rel target = $region3
  $region8: #{recurrent_q_forward.1} parent=0 // loop_exit
    _

</llo_original>
